<compile_context>
chip_gen: v6e
topology: v6e:2x2x1
jax: 0.10.0
libtpu: 0.0.40
codegen_flags: <defaults>
</compile_context>

<pallas_src>
import math

import jax
import jax.numpy as jnp
from jax import lax
from jax.experimental import pallas as pl
from jax.experimental.pallas import tpu as pltpu

C_IN, C_OUT, KS, STRIDE = 7, 64, 100, 20
N_SHIFTS = KS // STRIDE          # 5 : the kernel window spans 5 stride-frames
K_FRAME = C_IN * STRIDE          # 140 : per-frame contraction depth


def _round_up(a, b):
    return (a + b - 1) // b * b


def _conv1d_kernel(f_ref, tail_ref, w_ref, o_ref):
    """One (batch, output-tile) grid step.

    f_ref    : (1, 140, tm)   frame columns [i*tm, i*tm + tm)         (bf16)
    tail_ref : (1, 140, 128)  frame columns [i*tm + tm, +128) overlap (bf16)
    w_ref    : (5, 64, 140)   per-shift weight slices, VMEM-resident  (bf16)
    o_ref    : (1, 64, tm)    output tile in final (C_out, L_out) layout (f32)
    """
    tm = o_ref.shape[2]
    ch = 256 if tm % 256 == 0 else 128     # output-column chunk (static)
    nc = tm // ch

    # Small stitched window for the last chunk only: frame cols [tm - ch, tm + 128).
    last_win = jnp.concatenate([f_ref[0, :, tm - ch:], tail_ref[0]], axis=1)

    for cc in range(nc):                   # static -> fully unrolled
        acc = jnp.zeros((C_OUT, ch), jnp.float32)
        for s in range(N_SHIFTS):          # static -> fully unrolled
            if cc < nc - 1:
                g = f_ref[0, :, cc * ch + s: cc * ch + s + ch]   # (140, ch) bf16
            else:
                g = last_win[:, s: s + ch]                        # (140, ch) bf16
            # (64, 140) @ (140, ch) -> (64, ch) on the MXU, f32 accumulate.
            acc = acc + jnp.dot(w_ref[s], g, preferred_element_type=jnp.float32)
        o_ref[0, :, cc * ch:(cc + 1) * ch] = acc.astype(o_ref.dtype)
    # TODO(synk): a single K=700 dot (MXU-internal accumulation) or a manually
    # double-buffered window DMA could shave a further ~10-30% on the MXU-bound
    # path; at bf16 the kernel is close to HBM-bound, so it is left out here.


def extractor_forward(x, weight, *, tm_max=2048):
    """x: (N, 7, L) f32; weight: (64, 7, 100) f32  ->  (N, 64, L_out) f32."""
    n, c, L = x.shape
    assert c == C_IN
    l_out = (L - KS) // STRIDE + 1
    assert l_out > 0

    # Output-position tile: multiple of 128 keeps the output lane-dense.
    tm = min(tm_max, _round_up(l_out, 128))
    # v7x load balance: with one batch row, make sure there are >= 2 output
    # blocks so both TensorCores get work under the "parallel" grid axes.
    if n == 1 and l_out > 128 and pl.cdiv(l_out, tm) < 2:
        tm = max(128, _round_up(pl.cdiv(l_out, 2), 128))
    n_blocks = pl.cdiv(l_out, tm)
    l_out_pad = n_blocks * tm

    # --- glue (single XLA fusion, ~1x input traffic) -------------------------
    # Transposed stride-wide frames: frames[n, c*20+j, f] = x[n, c, f*20+j];
    # output position t needs frame columns t .. t+4.
    n_frames = l_out + N_SHIFTS - 1
    xb = x.astype(jnp.bfloat16)
    xf = xb[:, :, : n_frames * STRIDE]
    xf = xf.reshape(n, C_IN, n_frames, STRIDE)
    xf = xf.transpose(0, 1, 3, 2).reshape(n, K_FRAME, n_frames)
    f_pad = l_out_pad + 128                          # only what the tail block reads
    frames = jnp.pad(xf, ((0, 0), (0, 0), (0, f_pad - n_frames)))

    # weight -> (5, 64, 140): w_stack[s, co, c*20+j] = weight[co, c, s*20+j]
    w_stack = weight.astype(jnp.bfloat16).reshape(C_OUT, C_IN, N_SHIFTS, STRIDE)
    w_stack = jnp.transpose(w_stack, (2, 0, 1, 3)).reshape(N_SHIFTS, C_OUT, K_FRAME)

    # --- hot path: tiled, pipelined Pallas kernel ----------------------------
    out = pl.pallas_call(
        _conv1d_kernel,
        out_shape=jax.ShapeDtypeStruct((n, C_OUT, l_out_pad), jnp.float32),
        grid=(n, n_blocks),
        in_specs=[
            # main frame tile for this output tile (positions lane-dense)
            pl.BlockSpec((1, K_FRAME, tm), lambda b, i: (b, 0, i)),
            # 128-lane overlap tail (first frames past this tile)
            pl.BlockSpec((1, K_FRAME, 128),
                         lambda b, i: (b, 0, (i + 1) * (tm // 128))),
            # weights: constant index -> stays VMEM-resident across grid steps
            pl.BlockSpec((N_SHIFTS, C_OUT, K_FRAME), lambda b, i: (0, 0, 0)),
        ],
        out_specs=pl.BlockSpec((1, C_OUT, tm), lambda b, i: (b, 0, i)),
        compiler_params=pltpu.CompilerParams(
            dimension_semantics=("parallel", "parallel")),
    )(frames, frames, w_stack)

    # drop padded output positions; already in PyTorch (N, C_out, L_out) layout
    return out[:, :, :l_out]


if __name__ == "__main__":
    key = jax.random.PRNGKey(0)
    kx, kw = jax.random.split(key)

    # batch=2, in_channels=7, length=300  ->  L_out = (300-100)//20 + 1 = 11
    N, L = 2, 300
    x = jax.random.normal(kx, (N, C_IN, L), dtype=jnp.float32)

    # Deterministic Conv1d-style weight init (uniform in [-b, b], b = 1/sqrt(C_in*KS))
    bound = 1.0 / math.sqrt(C_IN * KS)
    weight = jax.random.uniform(
        kw, (C_OUT, C_IN, KS), dtype=jnp.float32, minval=-bound, maxval=bound
    )

    y = jax.block_until_ready(jax.jit(extractor_forward)(x, weight))

    # Reference: XLA conv on the same bf16-rounded operands with f32 accumulation,
    # so the check isolates kernel correctness from the intentional bf16 cast.
    xr = x.astype(jnp.bfloat16).astype(jnp.float32)
    wr = weight.astype(jnp.bfloat16).astype(jnp.float32)
    y_ref = lax.conv_general_dilated(
        xr, wr, window_strides=(STRIDE,), padding="VALID",
        dimension_numbers=("NCH", "OIH", "NCH"),
        precision=lax.Precision.HIGHEST,
    )
    assert y.shape == (N, C_OUT, (L - KS) // STRIDE + 1), y.shape
    assert jnp.allclose(y, y_ref, atol=2e-3, rtol=2e-3), "mismatch vs reference conv"

    print("KERNEL_OK")
</pallas_src>

<mosaic_0001>
module attributes {stable_mosaic.version = 11 : i64} {
  func.func @_conv1d_kernel(%arg0: i32, %arg1: i32, %arg2: memref<1x140x128xbf16, #tpu.memory_space<vmem>>, %arg3: memref<1x140x128xbf16, #tpu.memory_space<vmem>>, %arg4: memref<5x64x140xbf16, #tpu.memory_space<vmem>>, %arg5: memref<1x64x128xf32, #tpu.memory_space<vmem>>) attributes {dimension_semantics = [#tpu.dimension_semantics<parallel>, #tpu.dimension_semantics<parallel>], iteration_bounds = array<i64: 2, 1>, scalar_prefetch = 0 : i64, scratch_operands = 0 : i64, tpu.core_type = #tpu.core_type<tc>, window_params = [{transform_indices = @transform_0, window_bounds = array<i64: 1, 140, 128>}, {transform_indices = @transform_1, window_bounds = array<i64: 1, 140, 128>}, {pipeline_mode = #tpu.pipeline_mode<synchronous>, transform_indices = @transform_2, window_bounds = array<i64: 5, 64, 140>}, {transform_indices = @transform_3, window_bounds = array<i64: 1, 64, 128>}]} {
    %c0 = arith.constant 0 : index
    %c0_0 = arith.constant 0 : index
    %c0_1 = arith.constant 0 : index
    %0 = vector.load %arg2[%c0, %c0_0, %c0_1] : memref<1x140x128xbf16, #tpu.memory_space<vmem>>, vector<1x140x128xbf16>
    %1 = vector.shape_cast %0 : vector<1x140x128xbf16> to vector<140x128xbf16>
    %c0_2 = arith.constant 0 : index
    %c0_3 = arith.constant 0 : index
    %c0_4 = arith.constant 0 : index
    %2 = vector.load %arg3[%c0_2, %c0_3, %c0_4] : memref<1x140x128xbf16, #tpu.memory_space<vmem>>, vector<1x140x128xbf16>
    %3 = vector.shape_cast %2 : vector<1x140x128xbf16> to vector<140x128xbf16>
    %4 = tpu.concatenate %1, %3 in 1 : vector<140x128xbf16>, vector<140x128xbf16> -> vector<140x256xbf16>
    %cst = arith.constant 0.000000e+00 : f32
    %5 = vector.broadcast %cst : f32 to vector<64x128xf32>
    %6 = vector.extract_strided_slice %4 {offsets = [0, 0], sizes = [140, 128], strides = [1, 1]} : vector<140x256xbf16> to vector<140x128xbf16>
    %c0_5 = arith.constant 0 : index
    %c0_6 = arith.constant 0 : index
    %c0_7 = arith.constant 0 : index
    %7 = vector.load %arg4[%c0_5, %c0_6, %c0_7] : memref<5x64x140xbf16, #tpu.memory_space<vmem>>, vector<1x64x140xbf16>
    %8 = vector.shape_cast %7 : vector<1x64x140xbf16> to vector<64x140xbf16>
    %cst_8 = arith.constant dense<0.000000e+00> : vector<64x128xf32>
    %9 = tpu.matmul %8, %6, %cst_8 {dimension_numbers = #tpu.dot_dimension_numbers<[1], [0], [0], [1], [0, 0, 1, 1], [], []>} : vector<64x140xbf16>, vector<140x128xbf16>, vector<64x128xf32> -> vector<64x128xf32>
    %10 = arith.addf %5, %9 : vector<64x128xf32>
    %11 = vector.extract_strided_slice %4 {offsets = [0, 1], sizes = [140, 128], strides = [1, 1]} : vector<140x256xbf16> to vector<140x128xbf16>
    %c1 = arith.constant 1 : index
    %c0_9 = arith.constant 0 : index
    %c0_10 = arith.constant 0 : index
    %12 = vector.load %arg4[%c1, %c0_9, %c0_10] : memref<5x64x140xbf16, #tpu.memory_space<vmem>>, vector<1x64x140xbf16>
    %13 = vector.shape_cast %12 : vector<1x64x140xbf16> to vector<64x140xbf16>
    %cst_11 = arith.constant dense<0.000000e+00> : vector<64x128xf32>
    %14 = tpu.matmul %13, %11, %cst_11 {dimension_numbers = #tpu.dot_dimension_numbers<[1], [0], [0], [1], [0, 0, 1, 1], [], []>} : vector<64x140xbf16>, vector<140x128xbf16>, vector<64x128xf32> -> vector<64x128xf32>
    %15 = arith.addf %10, %14 : vector<64x128xf32>
    %16 = vector.extract_strided_slice %4 {offsets = [0, 2], sizes = [140, 128], strides = [1, 1]} : vector<140x256xbf16> to vector<140x128xbf16>
    %c2 = arith.constant 2 : index
    %c0_12 = arith.constant 0 : index
    %c0_13 = arith.constant 0 : index
    %17 = vector.load %arg4[%c2, %c0_12, %c0_13] : memref<5x64x140xbf16, #tpu.memory_space<vmem>>, vector<1x64x140xbf16>
    %18 = vector.shape_cast %17 : vector<1x64x140xbf16> to vector<64x140xbf16>
    %cst_14 = arith.constant dense<0.000000e+00> : vector<64x128xf32>
    %19 = tpu.matmul %18, %16, %cst_14 {dimension_numbers = #tpu.dot_dimension_numbers<[1], [0], [0], [1], [0, 0, 1, 1], [], []>} : vector<64x140xbf16>, vector<140x128xbf16>, vector<64x128xf32> -> vector<64x128xf32>
    %20 = arith.addf %15, %19 : vector<64x128xf32>
    %21 = vector.extract_strided_slice %4 {offsets = [0, 3], sizes = [140, 128], strides = [1, 1]} : vector<140x256xbf16> to vector<140x128xbf16>
    %c3 = arith.constant 3 : index
    %c0_15 = arith.constant 0 : index
    %c0_16 = arith.constant 0 : index
    %22 = vector.load %arg4[%c3, %c0_15, %c0_16] : memref<5x64x140xbf16, #tpu.memory_space<vmem>>, vector<1x64x140xbf16>
    %23 = vector.shape_cast %22 : vector<1x64x140xbf16> to vector<64x140xbf16>
    %cst_17 = arith.constant dense<0.000000e+00> : vector<64x128xf32>
    %24 = tpu.matmul %23, %21, %cst_17 {dimension_numbers = #tpu.dot_dimension_numbers<[1], [0], [0], [1], [0, 0, 1, 1], [], []>} : vector<64x140xbf16>, vector<140x128xbf16>, vector<64x128xf32> -> vector<64x128xf32>
    %25 = arith.addf %20, %24 : vector<64x128xf32>
    %26 = vector.extract_strided_slice %4 {offsets = [0, 4], sizes = [140, 128], strides = [1, 1]} : vector<140x256xbf16> to vector<140x128xbf16>
    %c4 = arith.constant 4 : index
    %c0_18 = arith.constant 0 : index
    %c0_19 = arith.constant 0 : index
    %27 = vector.load %arg4[%c4, %c0_18, %c0_19] : memref<5x64x140xbf16, #tpu.memory_space<vmem>>, vector<1x64x140xbf16>
    %28 = vector.shape_cast %27 : vector<1x64x140xbf16> to vector<64x140xbf16>
    %cst_20 = arith.constant dense<0.000000e+00> : vector<64x128xf32>
    %29 = tpu.matmul %28, %26, %cst_20 {dimension_numbers = #tpu.dot_dimension_numbers<[1], [0], [0], [1], [0, 0, 1, 1], [], []>} : vector<64x140xbf16>, vector<140x128xbf16>, vector<64x128xf32> -> vector<64x128xf32>
    %30 = arith.addf %25, %29 : vector<64x128xf32>
    %c0_21 = arith.constant 0 : index
    %c0_22 = arith.constant 0 : index
    %c0_23 = arith.constant 0 : index
    %31 = vector.load %arg5[%c0_21, %c0_22, %c0_23] : memref<1x64x128xf32, #tpu.memory_space<vmem>>, vector<1x64x128xf32>
    %32 = vector.shape_cast %31 : vector<1x64x128xf32> to vector<64x128xf32>
    %33 = vector.shape_cast %30 : vector<64x128xf32> to vector<1x64x128xf32>
    tpu.vector_store %arg5[%c0_21, %c0_22, %c0_23], %33 {strides = array<i32>} : memref<1x64x128xf32, #tpu.memory_space<vmem>>, vector<1x64x128xf32>,
    return
  }
  func.func @transform_0(%arg0: i32, %arg1: i32) -> (i32, i32, i32) {
    %c0_i32 = arith.constant 0 : i32
    %c0_i32_0 = arith.constant 0 : i32
    return %arg0, %c0_i32, %arg1 : i32, i32, i32
  }
  func.func @transform_1(%arg0: i32, %arg1: i32) -> (i32, i32, i32) {
    %c1_i32 = arith.constant 1 : i32
    %0 = arith.addi %arg1, %c1_i32 : i32
    %c1_i32_0 = arith.constant 1 : i32
    %1 = arith.muli %0, %c1_i32_0 : i32
    %c0_i32 = arith.constant 0 : i32
    %c0_i32_1 = arith.constant 0 : i32
    return %arg0, %c0_i32, %1 : i32, i32, i32
  }
  func.func @transform_2(%arg0: i32, %arg1: i32) -> (i32, i32, i32) {
    %c0_i32 = arith.constant 0 : i32
    %c0_i32_0 = arith.constant 0 : i32
    %c0_i32_1 = arith.constant 0 : i32
    %c0_i32_2 = arith.constant 0 : i32
    return %c0_i32, %c0_i32_0, %c0_i32_1 : i32, i32, i32
  }
  func.func @transform_3(%arg0: i32, %arg1: i32) -> (i32, i32, i32) {
    %c0_i32 = arith.constant 0 : i32
    %c0_i32_0 = arith.constant 0 : i32
    return %arg0, %c0_i32, %arg1 : i32, i32, i32
  }
}

</mosaic_0001>

<llo_original>
// kernel: extractor_forward.1
$region0: #{extractor_forward.1}
  #allocation0 [shape = 'u32[]', space=smem, size = 0x4, offset = 0x4, fixed_abs, tag = 'smem constant byte address 0x4 - core index']
  #allocation1 [shape = 'u32[144,128]{1,0:T(1,128)}', space=vmem, size = 0x12000, scoped, tag = 'internal scratch']
  %s0 = inlined_call_operand.vmem [shape: bf16[2,140,256], index: 0, kind: input, shape index: {}, may-alias: {0,1}]
  %s1 = inlined_call_operand.vmem [shape: bf16[2,140,256], index: 1, kind: input, shape index: {}, may-alias: {0,1}]
  %s2 = inlined_call_operand.vmem [shape: bf16[5,64,140], index: 2, kind: input, shape index: {}]
  %s3 = inlined_call_operand.vmem [shape: f32[2,64,128], index: 3, kind: output, shape index: {}]
  %s4 = sld [smem:[#allocation0]]
  $region127: #{extractor_forward.1} parent=0
    _
  %s6 = ssub.s32 1, %s4
  %s7 = scalar_select 0, %s6, %s4
  $region1: #{extractor_forward.1} parent=0
    #allocation2 [shape = 'u8[73728]{0}', space=vmem, size = 0x12000, scoped, tag = 'input window, operand 0']
    #allocation3 [shape = 'u8[73728]{0}', space=vmem, size = 0x12000, scoped, tag = 'input window, operand 1']
    loop: start=0, step=1, limit=4
    $region2: #{extractor_forward.1} parent=1 // loop_pre_header
      _
    $region3: #{extractor_forward.1} parent=1 // loop_header
      %s9 = sphi 0, %s13
      %p10 = scmp.ge.s32.totalorder %s9, 4
      %s16 = sphi 0, %s28
      %s17 = sphi 0, %s24
      %s18 = sphi 0, %s16
      %s19 = sphi 0, %s17
      %s20 = sphi 0, %s18
      %s21 = sphi 0, %s19
      %s33 = sphi 0, %s35
      %s36 = sphi 0, %s33
      %s37 = sphi 0, %s36
      %s53 = sphi 0, %s37
      %s63 = sphi 0, %s65
      %s66 = sphi 0, %s63
      %s67 = sphi 0, %s66
      %s83 = sphi 0, %s67
      %s87 = sphi 0, %s87
      %s89 = sphi 0, %s87
      %s90 = sphi 0, %s89
      %s104 = sphi 0, %s90
      %s112 = sphi 0, %s114
      %s115 = sphi 0, %s112
      %s116 = sphi 0, %s115
      %s132 = sphi 0, %s116
    $region4: #{extractor_forward.1} parent=1 // loop_header_branch
      %12 = sbr.rel (%p10) target = $region8
    $region5: #{extractor_forward.1} parent=1 // loop_body
      %s14 = ssub.s32 %s9, 1
      %s15 = ssub.s32 %s9, 2
      %s22 = sadd.s32 1, %s17
      %p23 = scmp.ge.s32.totalorder %s22, 1
      %s24 = scalar_select %p23, 0, %s22
      %s25 = sadd.s32 1, %s16
      %s26 = scalar_select %p23, %s25, %s16
      %p27 = scmp.ge.s32.totalorder %s26, 2
      %s28 = scalar_select %p27, 0, %s26
      %s29 = ssub.s32 %s16, %s28
      %s30 = ssub.s32 %s17, %s24
      %s31 = sor.u32 %s29, %s30
      %p32 = scmp.eq.s32.totalorder %s31, 0
      %s34 = sadd.s32 %s33, 1
      %s35 = scalar_select %p32, %s33, %s34
      %p38 = pneg %p32
      %p39 = scmp.eq.s32.totalorder %s9, 1
      %p40 = por %p38, %p39
      %p41 = scmp.ne.s32.totalorder %s33, %s36
      %p42 = scmp.eq.s32.totalorder %s9, 0
      %p43 = por %p41, %p42
      %p44 = scmp.ne.s32.totalorder %s33, %s36
      %p45 = scmp.eq.s32.totalorder %s14, 1
      %p46 = por %p44, %p45
      %p47 = scmp.ne.s32.totalorder %s36, %s37
      %p48 = scmp.eq.s32.totalorder %s14, 0
      %p49 = por %p47, %p48
      %p50 = scmp.ne.s32.totalorder %s36, %s37
      %p51 = scmp.eq.s32.totalorder %s15, 1
      %p52 = por %p50, %p51
      %p54 = scmp.ne.s32.totalorder %s37, %s53
      %p55 = scmp.eq.s32.totalorder %s15, 0
      %p56 = por %p54, %p55
      %s57 = sadd.s32 %s17, 1
      %s58 = sadd.s32 %s24, 1
      %s59 = ssub.s32 %s16, %s28
      %s60 = ssub.s32 %s57, %s58
      %s61 = sor.u32 %s59, %s60
      %p62 = scmp.eq.s32.totalorder %s61, 0
      %s64 = sadd.s32 %s63, 1
      %s65 = scalar_select %p62, %s63, %s64
      %p68 = pneg %p62
      %p69 = scmp.eq.s32.totalorder %s9, 1
      %p70 = por %p68, %p69
      %p71 = scmp.ne.s32.totalorder %s63, %s66
      %p72 = scmp.eq.s32.totalorder %s9, 0
      %p73 = por %p71, %p72
      %p74 = scmp.ne.s32.totalorder %s63, %s66
      %p75 = scmp.eq.s32.totalorder %s14, 1
      %p76 = por %p74, %p75
      %p77 = scmp.ne.s32.totalorder %s66, %s67
      %p78 = scmp.eq.s32.totalorder %s14, 0
      %p79 = por %p77, %p78
      %p80 = scmp.ne.s32.totalorder %s66, %s67
      %p81 = scmp.eq.s32.totalorder %s15, 1
      %p82 = por %p80, %p81
      %p84 = scmp.ne.s32.totalorder %s67, %s83
      %p85 = scmp.eq.s32.totalorder %s15, 0
      %p86 = por %p84, %p85
      %s88 = sadd.s32 %s87, 1
      %p91 = scmp.eq.s32.totalorder %s9, 1
      %p92 = scmp.ne.s32.totalorder %s87, %s89
      %p93 = scmp.eq.s32.totalorder %s9, 0
      %p94 = por %p92, %p93
      %p95 = scmp.ne.s32.totalorder %s87, %s89
      %p96 = scmp.eq.s32.totalorder %s14, 1
      %p97 = por %p95, %p96
      %p98 = scmp.ne.s32.totalorder %s89, %s90
      %p99 = scmp.eq.s32.totalorder %s14, 0
      %p100 = por %p98, %p99
      %p101 = scmp.ne.s32.totalorder %s89, %s90
      %p102 = scmp.eq.s32.totalorder %s15, 1
      %p103 = por %p101, %p102
      %p105 = scmp.ne.s32.totalorder %s90, %s104
      %p106 = scmp.eq.s32.totalorder %s15, 0
      %p107 = por %p105, %p106
      %s108 = ssub.s32 %s16, %s28
      %s109 = ssub.s32 %s17, %s24
      %s110 = sor.u32 %s108, %s109
      %p111 = scmp.eq.s32.totalorder %s110, 0
      %s113 = sadd.s32 %s112, 1
      %s114 = scalar_select %p111, %s112, %s113
      %p117 = pneg %p111
      %p118 = scmp.eq.s32.totalorder %s9, 1
      %p119 = por %p117, %p118
      %p120 = scmp.ne.s32.totalorder %s112, %s115
      %p121 = scmp.eq.s32.totalorder %s9, 0
      %p122 = por %p120, %p121
      %p123 = scmp.ne.s32.totalorder %s112, %s115
      %p124 = scmp.eq.s32.totalorder %s14, 1
      %p125 = por %p123, %p124
      %p126 = scmp.ne.s32.totalorder %s115, %s116
      %p127 = scmp.eq.s32.totalorder %s14, 0
      %p128 = por %p126, %p127
      %p129 = scmp.ne.s32.totalorder %s115, %s116
      %p130 = scmp.eq.s32.totalorder %s15, 1
      %p131 = por %p129, %p130
      %p133 = scmp.ne.s32.totalorder %s116, %s132
      %p134 = scmp.eq.s32.totalorder %s15, 0
      %p135 = por %p133, %p134
      %p136 = scmp.le.s32.totalorder 1, %s9
      %p137 = scmp.lt.s32.totalorder %s9, 3
      %p138 = pnand %p136, %p137
      %p139 = pneg %p138
      // Predicated region
      $region9: #{extractor_forward.1} parent=5 // pred_check
        _
      $region10: #{extractor_forward.1} parent=5 // pred_check_branch
        %141 = sbr.rel (%p138) target = $region12
      $region11: #{extractor_forward.1} parent=5 // pred_region
        %s142 = ssub.s32 %s9, 1
        // Predicated region
        $region13: #{extractor_forward.1} parent=11 // pred_check
          %p143 = pneg %p100
        $region14: #{extractor_forward.1} parent=11 // pred_check_branch
          %145 = sbr.rel (%p143) target = $region16
        $region15: #{extractor_forward.1} parent=11 // pred_region
          _
        $region16: #{extractor_forward.1} parent=11 // pred_fallthru
          _
      $region12: #{extractor_forward.1} parent=5 // pred_fallthru
        _
      %p146 = scmp.lt.s32.totalorder %s9, 2
      // Predicated region
      $region17: #{extractor_forward.1} parent=5 // pred_check
        %p147 = pneg %p146
      $region18: #{extractor_forward.1} parent=5 // pred_check_branch
        %149 = sbr.rel (%p147) target = $region20
      $region19: #{extractor_forward.1} parent=5 // pred_region
        // Predicated region
        $region21: #{extractor_forward.1} parent=19 // pred_check
          %p150 = pneg %p43
        $region22: #{extractor_forward.1} parent=19 // pred_check_branch
          %152 = sbr.rel (%p150) target = $region24
        $region23: #{extractor_forward.1} parent=19 // pred_region
          %s153 = sand.u32 %s33, 1
          %s154 = sand.u32 %s33, 1
          %s155 = smul.addr %s154, 72
          %s156 = scalar_lea.vmem [#allocation2], %s155
          %s157 = smul.addr %s16, 36
          %s158 = sadd.s32 %s17, %s157
          %s159 = smul.addr %s158, 4
          %s160 = scalar_lea.vmem %s0, %s159
          // Predicated region
          $region25: #{extractor_forward.1} parent=23 // pred_check
            _
          $region26: #{extractor_forward.1} parent=23 // pred_check_branch
            %162 = sbr.rel (0) target = $region28
          $region27: #{extractor_forward.1} parent=23 // pred_region
            // Predicated region
            $region29: #{extractor_forward.1} parent=27 // pred_check
              _
            $region30: #{extractor_forward.1} parent=27 // pred_check_branch
              %164 = sbr.rel target = $region32
            $region31: #{extractor_forward.1} parent=27 // pred_region
              // Predicated region
              $region44: #{extractor_forward.1} parent=31 // pred_check
                _
              $region45: #{extractor_forward.1} parent=31 // pred_check_branch
                %214 = sbr.rel (0) target = $region47
              $region46: #{extractor_forward.1} parent=31 // pred_region
                loop: start=0, step=1, limit=1
                $region48: #{extractor_forward.1} parent=46 // loop_pre_header
                  _
                $region49: #{extractor_forward.1} parent=46 // loop_header
                  %s216 = sphi 0, %s220
                  %p217 = scmp.ge.s32.totalorder %s216, 1
                  %s221 = sphi %s160, %s160
                  %s222 = sphi %s156, %s156
                $region50: #{extractor_forward.1} parent=46 // loop_header_branch
                  %219 = sbr.rel (%p217) target = $region54
                $region51: #{extractor_forward.1} parent=46 // loop_body
                  _
                $region52: #{extractor_forward.1} parent=46 // loop_footer
                  %s220 = sadd.s32 1, %s216
                $region53: #{extractor_forward.1} parent=46 // loop_footer_branch
                  %215 = sbr.rel target = $region49
                $region54: #{extractor_forward.1} parent=46 // loop_exit
                  _
                %s224 = ssub.s32 16, 1
                loop: start=0, step=1, limit=1
                $region55: #{extractor_forward.1} parent=46 // loop_pre_header
                  _
                $region56: #{extractor_forward.1} parent=46 // loop_header
                  %s226 = sphi 0, %s230
                  %p227 = scmp.ge.s32.totalorder %s226, 1
                  %s231 = sphi %s160, %s160
                  %s232 = sphi %s156, %s156
                $region57: #{extractor_forward.1} parent=46 // loop_header_branch
                  %229 = sbr.rel (%p227) target = $region61
                $region58: #{extractor_forward.1} parent=46 // loop_body
                  %v233 = vld [vmem:[%s231] sm:%s224]
                  %234 = vst [vmem:[%s232] sm:%s224] %v233
                  %v235 = vld [vmem:[%s231 + $0x8] sm:%s224]
                  %236 = vst [vmem:[%s232 + $0x4] sm:%s224] %v235
                  %v237 = vld [vmem:[%s231 + $0x10] sm:%s224]
                  %238 = vst [vmem:[%s232 + $0x8] sm:%s224] %v237
                  %v239 = vld [vmem:[%s231 + $0x18] sm:%s224]
                  %240 = vst [vmem:[%s232 + $0xc] sm:%s224] %v239
                  %v241 = vld [vmem:[%s231 + $0x20] sm:%s224]
                  %242 = vst [vmem:[%s232 + $0x10] sm:%s224] %v241
                  %v243 = vld [vmem:[%s231 + $0x28] sm:%s224]
                  %244 = vst [vmem:[%s232 + $0x14] sm:%s224] %v243
                  %v245 = vld [vmem:[%s231 + $0x30] sm:%s224]
                  %246 = vst [vmem:[%s232 + $0x18] sm:%s224] %v245
                  %v247 = vld [vmem:[%s231 + $0x38] sm:%s224]
                  %248 = vst [vmem:[%s232 + $0x1c] sm:%s224] %v247
                  %v249 = vld [vmem:[%s231 + $0x40] sm:%s224]
                  %250 = vst [vmem:[%s232 + $0x20] sm:%s224] %v249
                  %v251 = vld [vmem:[%s231 + $0x48] sm:%s224]
                  %252 = vst [vmem:[%s232 + $0x24] sm:%s224] %v251
                  %v253 = vld [vmem:[%s231 + $0x50] sm:%s224]
                  %254 = vst [vmem:[%s232 + $0x28] sm:%s224] %v253
                  %v255 = vld [vmem:[%s231 + $0x58] sm:%s224]
                  %256 = vst [vmem:[%s232 + $0x2c] sm:%s224] %v255
                  %v257 = vld [vmem:[%s231 + $0x60] sm:%s224]
                  %258 = vst [vmem:[%s232 + $0x30] sm:%s224] %v257
                  %v259 = vld [vmem:[%s231 + $0x68] sm:%s224]
                  %260 = vst [vmem:[%s232 + $0x34] sm:%s224] %v259
                  %v261 = vld [vmem:[%s231 + $0x70] sm:%s224]
                  %262 = vst [vmem:[%s232 + $0x38] sm:%s224] %v261
                  %v263 = vld [vmem:[%s231 + $0x78] sm:%s224]
                  %264 = vst [vmem:[%s232 + $0x3c] sm:%s224] %v263
                  %v265 = vld [vmem:[%s231 + $0x80] sm:%s224]
                  %266 = vst [vmem:[%s232 + $0x40] sm:%s224] %v265
                  %v267 = vld [vmem:[%s231 + $0x88] sm:%s224]
                  %268 = vst [vmem:[%s232 + $0x44] sm:%s224] %v267
                $region59: #{extractor_forward.1} parent=46 // loop_footer
                  %s230 = sadd.s32 1, %s226
                $region60: #{extractor_forward.1} parent=46 // loop_footer_branch
                  %225 = sbr.rel target = $region56
                $region61: #{extractor_forward.1} parent=46 // loop_exit
                  _
              $region47: #{extractor_forward.1} parent=31 // pred_fallthru
                _
            $region32: #{extractor_forward.1} parent=27 // pred_fallthru
              _
            // Predicated region
            $region33: #{extractor_forward.1} parent=27 // pred_check
              _
            $region34: #{extractor_forward.1} parent=27 // pred_check_branch
              %166 = sbr.rel (0) target = $region36
            $region35: #{extractor_forward.1} parent=27 // pred_region
              %s168 = ssub.s32 16, 1
              loop: start=0, step=1, limit=1
              $region37: #{extractor_forward.1} parent=35 // loop_pre_header
                _
              $region38: #{extractor_forward.1} parent=35 // loop_header
                %s170 = sphi 0, %s174
                %p171 = scmp.ge.s32.totalorder %s170, 1
                %s175 = sphi %s160, %s160
                %s176 = sphi %s156, %s156
              $region39: #{extractor_forward.1} parent=35 // loop_header_branch
                %173 = sbr.rel (%p171) target = $region43
              $region40: #{extractor_forward.1} parent=35 // loop_body
                %v177 = vld [vmem:[%s175] sm:%s168]
                %178 = vst [vmem:[%s176] sm:%s168] %v177
                %v179 = vld [vmem:[%s175 + $0x8] sm:%s168]
                %180 = vst [vmem:[%s176 + $0x4] sm:%s168] %v179
                %v181 = vld [vmem:[%s175 + $0x10] sm:%s168]
                %182 = vst [vmem:[%s176 + $0x8] sm:%s168] %v181
                %v183 = vld [vmem:[%s175 + $0x18] sm:%s168]
                %184 = vst [vmem:[%s176 + $0xc] sm:%s168] %v183
                %v185 = vld [vmem:[%s175 + $0x20] sm:%s168]
                %186 = vst [vmem:[%s176 + $0x10] sm:%s168] %v185
                %v187 = vld [vmem:[%s175 + $0x28] sm:%s168]
                %188 = vst [vmem:[%s176 + $0x14] sm:%s168] %v187
                %v189 = vld [vmem:[%s175 + $0x30] sm:%s168]
                %190 = vst [vmem:[%s176 + $0x18] sm:%s168] %v189
                %v191 = vld [vmem:[%s175 + $0x38] sm:%s168]
                %192 = vst [vmem:[%s176 + $0x1c] sm:%s168] %v191
                %v193 = vld [vmem:[%s175 + $0x40] sm:%s168]
                %194 = vst [vmem:[%s176 + $0x20] sm:%s168] %v193
                %v195 = vld [vmem:[%s175 + $0x48] sm:%s168]
                %196 = vst [vmem:[%s176 + $0x24] sm:%s168] %v195
                %v197 = vld [vmem:[%s175 + $0x50] sm:%s168]
                %198 = vst [vmem:[%s176 + $0x28] sm:%s168] %v197
                %v199 = vld [vmem:[%s175 + $0x58] sm:%s168]
                %200 = vst [vmem:[%s176 + $0x2c] sm:%s168] %v199
                %v201 = vld [vmem:[%s175 + $0x60] sm:%s168]
                %202 = vst [vmem:[%s176 + $0x30] sm:%s168] %v201
                %v203 = vld [vmem:[%s175 + $0x68] sm:%s168]
                %204 = vst [vmem:[%s176 + $0x34] sm:%s168] %v203
                %v205 = vld [vmem:[%s175 + $0x70] sm:%s168]
                %206 = vst [vmem:[%s176 + $0x38] sm:%s168] %v205
                %v207 = vld [vmem:[%s175 + $0x78] sm:%s168]
                %208 = vst [vmem:[%s176 + $0x3c] sm:%s168] %v207
                %v209 = vld [vmem:[%s175 + $0x80] sm:%s168]
                %210 = vst [vmem:[%s176 + $0x40] sm:%s168] %v209
                %v211 = vld [vmem:[%s175 + $0x88] sm:%s168]
                %212 = vst [vmem:[%s176 + $0x44] sm:%s168] %v211
              $region41: #{extractor_forward.1} parent=35 // loop_footer
                %s174 = sadd.s32 1, %s170
              $region42: #{extractor_forward.1} parent=35 // loop_footer_branch
                %169 = sbr.rel target = $region38
              $region43: #{extractor_forward.1} parent=35 // loop_exit
                _
            $region36: #{extractor_forward.1} parent=27 // pred_fallthru
              _
          $region28: #{extractor_forward.1} parent=23 // pred_fallthru
            _
          %269 = vnop
        $region24: #{extractor_forward.1} parent=19 // pred_fallthru
          _
        // Predicated region
        $region62: #{extractor_forward.1} parent=19 // pred_check
          %p270 = pneg %p73
        $region63: #{extractor_forward.1} parent=19 // pred_check_branch
          %272 = sbr.rel (%p270) target = $region65
        $region64: #{extractor_forward.1} parent=19 // pred_region
          %s273 = sand.u32 %s63, 1
          %s274 = sand.u32 %s63, 1
          %s275 = smul.addr %s274, 72
          %s276 = scalar_lea.vmem [#allocation3], %s275
          %s277 = sadd.s32 %s17, 1
          %s278 = smul.addr %s16, 36
          %s279 = sadd.s32 %s277, %s278
          %s280 = smul.addr %s279, 4
          %s281 = scalar_lea.vmem %s1, %s280
          // Predicated region
          $region66: #{extractor_forward.1} parent=64 // pred_check
            _
          $region67: #{extractor_forward.1} parent=64 // pred_check_branch
            %283 = sbr.rel (0) target = $region69
          $region68: #{extractor_forward.1} parent=64 // pred_region
            // Predicated region
            $region70: #{extractor_forward.1} parent=68 // pred_check
              _
            $region71: #{extractor_forward.1} parent=68 // pred_check_branch
              %285 = sbr.rel target = $region73
            $region72: #{extractor_forward.1} parent=68 // pred_region
              // Predicated region
              $region85: #{extractor_forward.1} parent=72 // pred_check
                _
              $region86: #{extractor_forward.1} parent=72 // pred_check_branch
                %335 = sbr.rel (0) target = $region88
              $region87: #{extractor_forward.1} parent=72 // pred_region
                loop: start=0, step=1, limit=1
                $region89: #{extractor_forward.1} parent=87 // loop_pre_header
                  _
                $region90: #{extractor_forward.1} parent=87 // loop_header
                  %s337 = sphi 0, %s341
                  %p338 = scmp.ge.s32.totalorder %s337, 1
                  %s342 = sphi %s281, %s281
                  %s343 = sphi %s276, %s276
                $region91: #{extractor_forward.1} parent=87 // loop_header_branch
                  %340 = sbr.rel (%p338) target = $region95
                $region92: #{extractor_forward.1} parent=87 // loop_body
                  _
                $region93: #{extractor_forward.1} parent=87 // loop_footer
                  %s341 = sadd.s32 1, %s337
                $region94: #{extractor_forward.1} parent=87 // loop_footer_branch
                  %336 = sbr.rel target = $region90
                $region95: #{extractor_forward.1} parent=87 // loop_exit
                  _
                %s345 = ssub.s32 16, 1
                loop: start=0, step=1, limit=1
                $region96: #{extractor_forward.1} parent=87 // loop_pre_header
                  _
                $region97: #{extractor_forward.1} parent=87 // loop_header
                  %s347 = sphi 0, %s351
                  %p348 = scmp.ge.s32.totalorder %s347, 1
                  %s352 = sphi %s281, %s281
                  %s353 = sphi %s276, %s276
                $region98: #{extractor_forward.1} parent=87 // loop_header_branch
                  %350 = sbr.rel (%p348) target = $region102
                $region99: #{extractor_forward.1} parent=87 // loop_body
                  %v354 = vld [vmem:[%s352] sm:%s345]
                  %355 = vst [vmem:[%s353] sm:%s345] %v354
                  %v356 = vld [vmem:[%s352 + $0x8] sm:%s345]
                  %357 = vst [vmem:[%s353 + $0x4] sm:%s345] %v356
                  %v358 = vld [vmem:[%s352 + $0x10] sm:%s345]
                  %359 = vst [vmem:[%s353 + $0x8] sm:%s345] %v358
                  %v360 = vld [vmem:[%s352 + $0x18] sm:%s345]
                  %361 = vst [vmem:[%s353 + $0xc] sm:%s345] %v360
                  %v362 = vld [vmem:[%s352 + $0x20] sm:%s345]
                  %363 = vst [vmem:[%s353 + $0x10] sm:%s345] %v362
                  %v364 = vld [vmem:[%s352 + $0x28] sm:%s345]
                  %365 = vst [vmem:[%s353 + $0x14] sm:%s345] %v364
                  %v366 = vld [vmem:[%s352 + $0x30] sm:%s345]
                  %367 = vst [vmem:[%s353 + $0x18] sm:%s345] %v366
                  %v368 = vld [vmem:[%s352 + $0x38] sm:%s345]
                  %369 = vst [vmem:[%s353 + $0x1c] sm:%s345] %v368
                  %v370 = vld [vmem:[%s352 + $0x40] sm:%s345]
                  %371 = vst [vmem:[%s353 + $0x20] sm:%s345] %v370
                  %v372 = vld [vmem:[%s352 + $0x48] sm:%s345]
                  %373 = vst [vmem:[%s353 + $0x24] sm:%s345] %v372
                  %v374 = vld [vmem:[%s352 + $0x50] sm:%s345]
                  %375 = vst [vmem:[%s353 + $0x28] sm:%s345] %v374
                  %v376 = vld [vmem:[%s352 + $0x58] sm:%s345]
                  %377 = vst [vmem:[%s353 + $0x2c] sm:%s345] %v376
                  %v378 = vld [vmem:[%s352 + $0x60] sm:%s345]
                  %379 = vst [vmem:[%s353 + $0x30] sm:%s345] %v378
                  %v380 = vld [vmem:[%s352 + $0x68] sm:%s345]
                  %381 = vst [vmem:[%s353 + $0x34] sm:%s345] %v380
                  %v382 = vld [vmem:[%s352 + $0x70] sm:%s345]
                  %383 = vst [vmem:[%s353 + $0x38] sm:%s345] %v382
                  %v384 = vld [vmem:[%s352 + $0x78] sm:%s345]
                  %385 = vst [vmem:[%s353 + $0x3c] sm:%s345] %v384
                  %v386 = vld [vmem:[%s352 + $0x80] sm:%s345]
                  %387 = vst [vmem:[%s353 + $0x40] sm:%s345] %v386
                  %v388 = vld [vmem:[%s352 + $0x88] sm:%s345]
                  %389 = vst [vmem:[%s353 + $0x44] sm:%s345] %v388
                $region100: #{extractor_forward.1} parent=87 // loop_footer
                  %s351 = sadd.s32 1, %s347
                $region101: #{extractor_forward.1} parent=87 // loop_footer_branch
                  %346 = sbr.rel target = $region97
                $region102: #{extractor_forward.1} parent=87 // loop_exit
                  _
              $region88: #{extractor_forward.1} parent=72 // pred_fallthru
                _
            $region73: #{extractor_forward.1} parent=68 // pred_fallthru
              _
            // Predicated region
            $region74: #{extractor_forward.1} parent=68 // pred_check
              _
            $region75: #{extractor_forward.1} parent=68 // pred_check_branch
              %287 = sbr.rel (0) target = $region77
            $region76: #{extractor_forward.1} parent=68 // pred_region
              %s289 = ssub.s32 16, 1
              loop: start=0, step=1, limit=1
              $region78: #{extractor_forward.1} parent=76 // loop_pre_header
                _
              $region79: #{extractor_forward.1} parent=76 // loop_header
                %s291 = sphi 0, %s295
                %p292 = scmp.ge.s32.totalorder %s291, 1
                %s296 = sphi %s281, %s281
                %s297 = sphi %s276, %s276
              $region80: #{extractor_forward.1} parent=76 // loop_header_branch
                %294 = sbr.rel (%p292) target = $region84
              $region81: #{extractor_forward.1} parent=76 // loop_body
                %v298 = vld [vmem:[%s296] sm:%s289]
                %299 = vst [vmem:[%s297] sm:%s289] %v298
                %v300 = vld [vmem:[%s296 + $0x8] sm:%s289]
                %301 = vst [vmem:[%s297 + $0x4] sm:%s289] %v300
                %v302 = vld [vmem:[%s296 + $0x10] sm:%s289]
                %303 = vst [vmem:[%s297 + $0x8] sm:%s289] %v302
                %v304 = vld [vmem:[%s296 + $0x18] sm:%s289]
                %305 = vst [vmem:[%s297 + $0xc] sm:%s289] %v304
                %v306 = vld [vmem:[%s296 + $0x20] sm:%s289]
                %307 = vst [vmem:[%s297 + $0x10] sm:%s289] %v306
                %v308 = vld [vmem:[%s296 + $0x28] sm:%s289]
                %309 = vst [vmem:[%s297 + $0x14] sm:%s289] %v308
                %v310 = vld [vmem:[%s296 + $0x30] sm:%s289]
                %311 = vst [vmem:[%s297 + $0x18] sm:%s289] %v310
                %v312 = vld [vmem:[%s296 + $0x38] sm:%s289]
                %313 = vst [vmem:[%s297 + $0x1c] sm:%s289] %v312
                %v314 = vld [vmem:[%s296 + $0x40] sm:%s289]
                %315 = vst [vmem:[%s297 + $0x20] sm:%s289] %v314
                %v316 = vld [vmem:[%s296 + $0x48] sm:%s289]
                %317 = vst [vmem:[%s297 + $0x24] sm:%s289] %v316
                %v318 = vld [vmem:[%s296 + $0x50] sm:%s289]
                %319 = vst [vmem:[%s297 + $0x28] sm:%s289] %v318
                %v320 = vld [vmem:[%s296 + $0x58] sm:%s289]
                %321 = vst [vmem:[%s297 + $0x2c] sm:%s289] %v320
                %v322 = vld [vmem:[%s296 + $0x60] sm:%s289]
                %323 = vst [vmem:[%s297 + $0x30] sm:%s289] %v322
                %v324 = vld [vmem:[%s296 + $0x68] sm:%s289]
                %325 = vst [vmem:[%s297 + $0x34] sm:%s289] %v324
                %v326 = vld [vmem:[%s296 + $0x70] sm:%s289]
                %327 = vst [vmem:[%s297 + $0x38] sm:%s289] %v326
                %v328 = vld [vmem:[%s296 + $0x78] sm:%s289]
                %329 = vst [vmem:[%s297 + $0x3c] sm:%s289] %v328
                %v330 = vld [vmem:[%s296 + $0x80] sm:%s289]
                %331 = vst [vmem:[%s297 + $0x40] sm:%s289] %v330
                %v332 = vld [vmem:[%s296 + $0x88] sm:%s289]
                %333 = vst [vmem:[%s297 + $0x44] sm:%s289] %v332
              $region82: #{extractor_forward.1} parent=76 // loop_footer
                %s295 = sadd.s32 1, %s291
              $region83: #{extractor_forward.1} parent=76 // loop_footer_branch
                %290 = sbr.rel target = $region79
              $region84: #{extractor_forward.1} parent=76 // loop_exit
                _
            $region77: #{extractor_forward.1} parent=68 // pred_fallthru
              _
          $region69: #{extractor_forward.1} parent=64 // pred_fallthru
            _
          %390 = vnop
        $region65: #{extractor_forward.1} parent=19 // pred_fallthru
          _
      $region20: #{extractor_forward.1} parent=5 // pred_fallthru
        _
      %p391 = scmp.le.s32.totalorder 1, %s9
      %p392 = scmp.lt.s32.totalorder %s9, 3
      %p393 = pnand %p391, %p392
      %p394 = pneg %p393
      // Predicated region
      $region103: #{extractor_forward.1} parent=5 // pred_check
        _
      $region104: #{extractor_forward.1} parent=5 // pred_check_branch
        %396 = sbr.rel (%p393) target = $region106
      $region105: #{extractor_forward.1} parent=5 // pred_region
        %s397 = ssub.s32 %s9, 1
        %s398 = sand.u32 %s36, 1
        %s399 = sand.u32 %s36, 1
        %s400 = smul.addr %s399, 72
        %s401 = scalar_lea.vmem [#allocation2], %s400
        // Predicated region
        $region107: #{extractor_forward.1} parent=105 // pred_check
          %p402 = pneg %p49
        $region108: #{extractor_forward.1} parent=105 // pred_check_branch
          %404 = sbr.rel (%p402) target = $region110
        $region109: #{extractor_forward.1} parent=105 // pred_region
          _
        $region110: #{extractor_forward.1} parent=105 // pred_fallthru
          _
        %s405 = sand.u32 %s66, 1
        %s406 = sand.u32 %s66, 1
        %s407 = smul.addr %s406, 72
        %s408 = scalar_lea.vmem [#allocation3], %s407
        // Predicated region
        $region111: #{extractor_forward.1} parent=105 // pred_check
          %p409 = pneg %p79
        $region112: #{extractor_forward.1} parent=105 // pred_check_branch
          %411 = sbr.rel (%p409) target = $region114
        $region113: #{extractor_forward.1} parent=105 // pred_region
          _
        $region114: #{extractor_forward.1} parent=105 // pred_fallthru
          _
        %s412 = sand.u32 %s36, 1
        %s413 = sand.u32 %s36, 1
        %s414 = smul.addr %s413, 72
        %s415 = scalar_lea.vmem [#allocation2], %s414
        %p416 = pneg %p49
        %p417 = pneg %p46
        %s418 = sand.u32 %s66, 1
        %s419 = sand.u32 %s66, 1
        %s420 = smul.addr %s419, 72
        %s421 = scalar_lea.vmem [#allocation3], %s420
        %p422 = pneg %p79
        %p423 = pneg %p76
        %p424 = pneg %p100
        %p425 = pneg %p97
        %p426 = pneg %p128
        %p427 = pneg %p125
        %p428 = scmp.lt.s32.totalorder %s18, 1
        %s429 = scalar_select %p428, %s18, 1
        %p430 = scmp.lt.s32.totalorder %s19, 0
        %s431 = scalar_select %p430, %s19, 0
        %s432 = smul.addr %s429, 8
        %s433 = sadd.s32 %s431, %s432
        %s434 = smul.addr %s433, 8
        %s435 = scalar_lea.vmem %s3, %s434
        %s436 = sadd.s32 %s19, 1
        %p437 = scmp.lt.s32.totalorder %s18, 1
        %s438 = scalar_select %p437, %s18, 1
        %p439 = scmp.lt.s32.totalorder %s19, 0
        %s440 = scalar_select %p439, %s19, 0
        %s441 = smul.addr %s438, 8
        %s442 = sadd.s32 %s440, %s441
        %s443 = smul.addr %s442, 8
        %s444 = scalar_lea.vmem %s3, %s443
        %v446 = vld [vmem:[%s401] sm:$0xf]
        %v447 = vld [vmem:[%s401 + $0x4] sm:$0xf]
        %v448 = vld [vmem:[%s401 + $0x8] sm:$0xf]
        %v449 = vld [vmem:[%s401 + $0xc] sm:$0xf]
        %v450 = vld [vmem:[%s401 + $0x10] sm:$0xf]
        %v451 = vld [vmem:[%s401 + $0x14] sm:$0xf]
        %v452 = vld [vmem:[%s401 + $0x18] sm:$0xf]
        %v453 = vld [vmem:[%s401 + $0x1c] sm:$0xf]
        %v454 = vld [vmem:[%s401 + $0x20] sm:$0xf]
        %v455 = vld [vmem:[%s401 + $0x24] sm:$0xf]
        %v456 = vld [vmem:[%s401 + $0x28] sm:$0xf]
        %v457 = vld [vmem:[%s401 + $0x2c] sm:$0xf]
        %v458 = vld [vmem:[%s401 + $0x30] sm:$0xf]
        %v459 = vld [vmem:[%s401 + $0x34] sm:$0xf]
        %v460 = vld [vmem:[%s401 + $0x38] sm:$0xf]
        %v461 = vld [vmem:[%s401 + $0x3c] sm:$0xf]
        %v462 = vld [vmem:[%s401 + $0x40] sm:$0xf]
        %v463 = vld [vmem:[%s401 + $0x44] sm:$0x3]
        %v464 = vld [vmem:[%s408] sm:$0xf]
        %v465 = vld [vmem:[%s408 + $0x4] sm:$0xf]
        %v466 = vld [vmem:[%s408 + $0x8] sm:$0xf]
        %v467 = vld [vmem:[%s408 + $0xc] sm:$0xf]
        %v468 = vld [vmem:[%s408 + $0x10] sm:$0xf]
        %v469 = vld [vmem:[%s408 + $0x14] sm:$0xf]
        %v470 = vld [vmem:[%s408 + $0x18] sm:$0xf]
        %v471 = vld [vmem:[%s408 + $0x1c] sm:$0xf]
        %v472 = vld [vmem:[%s408 + $0x20] sm:$0xf]
        %v473 = vld [vmem:[%s408 + $0x24] sm:$0xf]
        %v474 = vld [vmem:[%s408 + $0x28] sm:$0xf]
        %v475 = vld [vmem:[%s408 + $0x2c] sm:$0xf]
        %v476 = vld [vmem:[%s408 + $0x30] sm:$0xf]
        %v477 = vld [vmem:[%s408 + $0x34] sm:$0xf]
        %v478 = vld [vmem:[%s408 + $0x38] sm:$0xf]
        %v479 = vld [vmem:[%s408 + $0x3c] sm:$0xf]
        %v480 = vld [vmem:[%s408 + $0x40] sm:$0xf]
        %v481 = vld [vmem:[%s408 + $0x44] sm:$0x3]
        %v500 = vunpack.c.l.b16 %v446
        %v501 = vunpack.c.l.b16 %v447
        %v502 = vunpack.c.l.b16 %v448
        %v503 = vunpack.c.l.b16 %v449
        %v504 = vunpack.c.l.b16 %v450
        %v505 = vunpack.c.l.b16 %v451
        %v506 = vunpack.c.l.b16 %v452
        %v507 = vunpack.c.l.b16 %v453
        %v508 = vunpack.c.l.b16 %v454
        %v509 = vunpack.c.l.b16 %v455
        %v510 = vunpack.c.l.b16 %v456
        %v511 = vunpack.c.l.b16 %v457
        %v512 = vunpack.c.l.b16 %v458
        %v513 = vunpack.c.l.b16 %v459
        %v514 = vunpack.c.l.b16 %v460
        %v515 = vunpack.c.l.b16 %v461
        %v516 = vunpack.c.l.b16 %v462
        %v517 = vunpack.c.l.b16 %v463
        %v518 = vpack.c.b16 %v501, %v500
        %v519 = vpack.c.b16 %v503, %v502
        %v520 = vpack.c.b16 %v505, %v504
        %v521 = vpack.c.b16 %v507, %v506
        %v522 = vpack.c.b16 %v509, %v508
        %v523 = vpack.c.b16 %v511, %v510
        %v524 = vpack.c.b16 %v513, %v512
        %v525 = vpack.c.b16 %v515, %v514
        %v526 = vpack.c.b16 %v517, %v516
        %v553 = vunpack.c.l.b16 %v464
        %v554 = vunpack.c.l.b16 %v465
        %v555 = vunpack.c.l.b16 %v466
        %v556 = vunpack.c.l.b16 %v467
        %v557 = vunpack.c.l.b16 %v468
        %v558 = vunpack.c.l.b16 %v469
        %v559 = vunpack.c.l.b16 %v470
        %v560 = vunpack.c.l.b16 %v471
        %v561 = vunpack.c.l.b16 %v472
        %v562 = vunpack.c.l.b16 %v473
        %v563 = vunpack.c.l.b16 %v474
        %v564 = vunpack.c.l.b16 %v475
        %v565 = vunpack.c.l.b16 %v476
        %v566 = vunpack.c.l.b16 %v477
        %v567 = vunpack.c.l.b16 %v478
        %v568 = vunpack.c.l.b16 %v479
        %v569 = vunpack.c.l.b16 %v480
        %v570 = vunpack.c.l.b16 %v481
        %v571 = vpack.c.b16 %v554, %v553
        %v572 = vpack.c.b16 %v556, %v555
        %v573 = vpack.c.b16 %v558, %v557
        %v574 = vpack.c.b16 %v560, %v559
        %v575 = vpack.c.b16 %v562, %v561
        %v576 = vpack.c.b16 %v564, %v563
        %v577 = vpack.c.b16 %v566, %v565
        %v578 = vpack.c.b16 %v568, %v567
        %v579 = vpack.c.b16 %v570, %v569
        %v580 = vld [vmem:[%s2] sm:$0xff]
        %v581 = vld [vmem:[%s2 + $0x8] sm:$0xff]
        %v582 = vld [vmem:[%s2 + $0x10] sm:$0xff]
        %v583 = vld [vmem:[%s2 + $0x18] sm:$0xff]
        %v584 = vld [vmem:[%s2 + $0x20] sm:$0xff]
        %v585 = vld [vmem:[%s2 + $0x28] sm:$0xff]
        %v586 = vld [vmem:[%s2 + $0x30] sm:$0xff]
        %v587 = vld [vmem:[%s2 + $0x38] sm:$0xff]
        %s588 = scalar_lea.vmem %s2, 64
        %v589 = vld [vmem:[%s588] sm:$0xff]
        %v590 = vld [vmem:[%s588 + $0x8] sm:$0xff]
        %v591 = vld [vmem:[%s588 + $0x10] sm:$0xff]
        %v592 = vld [vmem:[%s588 + $0x18] sm:$0xff]
        %v593 = vld [vmem:[%s588 + $0x20] sm:$0xff]
        %v594 = vld [vmem:[%s588 + $0x28] sm:$0xff]
        %v595 = vld [vmem:[%s588 + $0x30] sm:$0xff]
        %v596 = vld [vmem:[%s588 + $0x38] sm:$0xff]
        %v605 = vunpack.c.l.b16 %v589
        %v606 = vunpack.c.h.b16 %v589
        %v607 = vunpack.c.l.b16 %v590
        %v608 = vunpack.c.h.b16 %v590
        %v609 = vunpack.c.l.b16 %v591
        %v610 = vunpack.c.h.b16 %v591
        %v611 = vunpack.c.l.b16 %v592
        %v612 = vunpack.c.h.b16 %v592
        %v613 = vunpack.c.l.b16 %v593
        %v614 = vunpack.c.h.b16 %v593
        %v615 = vunpack.c.l.b16 %v594
        %v616 = vunpack.c.h.b16 %v594
        %v617 = vunpack.c.l.b16 %v595
        %v618 = vunpack.c.h.b16 %v595
        %v619 = vunpack.c.l.b16 %v596
        %v620 = vunpack.c.h.b16 %v596
        %v621 = vpack.c.b16 %v607, %v605
        %v622 = vpack.c.b16 %v608, %v606
        %v623 = vpack.c.b16 %v611, %v609
        %v624 = vpack.c.b16 %v612, %v610
        %v625 = vpack.c.b16 %v615, %v613
        %v626 = vpack.c.b16 %v616, %v614
        %v627 = vpack.c.b16 %v619, %v617
        %v628 = vpack.c.b16 %v620, %v618
        %633 = vrot.lane.b32.xlu0 %v518, 127
        %v634 = vpop.permute.xlu0 %633
        %635 = vrot.lane.b32.xlu0 %v571, 127
        %v636 = vpop.permute.xlu0 %635
        %637 = vrot.lane.b32.xlu0 %v519, 127
        %v638 = vpop.permute.xlu0 %637
        %639 = vrot.lane.b32.xlu0 %v572, 127
        %v640 = vpop.permute.xlu0 %639
        %641 = vrot.lane.b32.xlu0 %v520, 127
        %v642 = vpop.permute.xlu0 %641
        %643 = vrot.lane.b32.xlu0 %v573, 127
        %v644 = vpop.permute.xlu0 %643
        %645 = vrot.lane.b32.xlu0 %v521, 127
        %v646 = vpop.permute.xlu0 %645
        %647 = vrot.lane.b32.xlu0 %v574, 127
        %v648 = vpop.permute.xlu0 %647
        %649 = vrot.lane.b32.xlu0 %v522, 127
        %v650 = vpop.permute.xlu0 %649
        %651 = vrot.lane.b32.xlu0 %v575, 127
        %v652 = vpop.permute.xlu0 %651
        %653 = vrot.lane.b32.xlu0 %v523, 127
        %v654 = vpop.permute.xlu0 %653
        %655 = vrot.lane.b32.xlu0 %v576, 127
        %v656 = vpop.permute.xlu0 %655
        %657 = vrot.lane.b32.xlu0 %v524, 127
        %v658 = vpop.permute.xlu0 %657
        %659 = vrot.lane.b32.xlu0 %v577, 127
        %v660 = vpop.permute.xlu0 %659
        %661 = vrot.lane.b32.xlu0 %v525, 127
        %v662 = vpop.permute.xlu0 %661
        %663 = vrot.lane.b32.xlu0 %v578, 127
        %v664 = vpop.permute.xlu0 %663
        %665 = vrot.lane.b32.xlu0 %v526, 127
        %v666 = vpop.permute.xlu0 %665
        %667 = vrot.lane.b32.xlu0 %v579, 127
        %v668 = vpop.permute.xlu0 %667
        %vm669 = vcmask 1039360
        %v670 = vsel %vm669, %v634, %v636
        %v671 = vsel %vm669, %v638, %v640
        %v672 = vsel %vm669, %v642, %v644
        %v673 = vsel %vm669, %v646, %v648
        %v674 = vsel %vm669, %v650, %v652
        %v675 = vsel %vm669, %v654, %v656
        %v676 = vsel %vm669, %v658, %v660
        %v677 = vsel %vm669, %v662, %v664
        %v678 = vsel %vm669, %v666, %v668
        %vm687 = vcmask 97280
        %v689 = vsel %vm687, %v622, 0
        %v692 = vsel %vm687, %v624, 0
        %v695 = vsel %vm687, %v626, 0
        %v698 = vsel %vm687, %v628, 0
        %vm700 = vcmask 1045504
        %v702 = vsel %vm700, %v678, 0
        %704 = vmatprep.subr.bf16.mxu0 0
        %705 = vmatpush1.bf16.msra.mxu0 %v677
        %706 = vmatprep.subr.bf16.mxu0 0
        %707 = vmatpush1.bf16.msra.mxu0 %v676
        %708 = vmatprep.subr.bf16.mxu0 0
        %709 = vmatpush1.bf16.msra.mxu0 %v675
        %710 = vmatprep.subr.bf16.mxu0 0
        %711 = vmatpush1.bf16.msra.mxu0 %v674
        %712 = vmatprep.subr.bf16.mxu0 0
        %713 = vmatpush1.bf16.msra.mxu0 %v673
        %714 = vmatprep.subr.bf16.mxu0 0
        %715 = vmatpush1.bf16.msra.mxu0 %v672
        %716 = vmatprep.subr.bf16.mxu0 0
        %717 = vmatpush1.bf16.msra.mxu0 %v671
        %718 = vmatprep.subr.bf16.mxu0 0
        %719 = vmatpush1.bf16.msra.mxu0 %v670
        %720 = vmatprep.subr.bf16.mxu0 0
        %721 = vmatpush2.bf16.msra.mxu0 0
        %722 = vmatprep.subr.bf16.mxu0 0
        %723 = vmatpush2.bf16.msra.mxu0 0
        %724 = vmatprep.subr.bf16.mxu0 0
        %725 = vmatpush2.bf16.msra.mxu0 0
        %726 = vmatprep.subr.bf16.mxu0 0
        %727 = vmatpush2.bf16.msra.mxu0 0
        %728 = vmatprep.subr.bf16.mxu0 0
        %729 = vmatpush2.bf16.msra.mxu0 0
        %730 = vmatprep.subr.bf16.mxu0 0
        %731 = vmatpush2.bf16.msra.mxu0 0
        %732 = vmatprep.subr.bf16.mxu0 0
        %733 = vmatpush2.bf16.msra.mxu0 0
        %734 = vmatprep.subr.bf16.mxu0 0
        %735 = vmatpush2.bf16.msra.mxu0 %v702
        %736 = vmatprep.mubr.bf16.mxu0 %v689
        %737 = vmatmul.mubr.bf16.gmra.mxu0 %v621
        %v738 = vpop.f32.mrf.mxu0
        %v739 = vadd.f32 0.0, %v738
        %v740 = vpop.f32.mrf.mxu0
        %v741 = vpop.f32.mrf.mxu0
        %v742 = vadd.f32 0.0, %v741
        %v743 = vpop.f32.mrf.mxu0
        %744 = vmatprep.mubr.bf16.mxu0 %v692
        %745 = vmatmul.mubr.bf16.gmra.mxu0 %v623
        %v746 = vpop.f32.mrf.mxu0
        %v747 = vadd.f32 0.0, %v746
        %v748 = vpop.f32.mrf.mxu0
        %v749 = vpop.f32.mrf.mxu0
        %v750 = vadd.f32 0.0, %v749
        %v751 = vpop.f32.mrf.mxu0
        %752 = vmatprep.mubr.bf16.mxu0 %v695
        %753 = vmatmul.mubr.bf16.gmra.mxu0 %v625
        %v754 = vpop.f32.mrf.mxu0
        %v755 = vadd.f32 0.0, %v754
        %v756 = vpop.f32.mrf.mxu0
        %v757 = vpop.f32.mrf.mxu0
        %v758 = vadd.f32 0.0, %v757
        %v759 = vpop.f32.mrf.mxu0
        %760 = vmatprep.mubr.bf16.mxu0 %v698
        %761 = vmatmul.mubr.bf16.gmra.mxu0 %v627
        %v762 = vpop.f32.mrf.mxu0
        %v763 = vadd.f32 0.0, %v762
        %v764 = vpop.f32.mrf.mxu0
        %v765 = vpop.f32.mrf.mxu0
        %v766 = vadd.f32 0.0, %v765
        %v767 = vpop.f32.mrf.mxu0
        %768 = vdwg.mxu0
        %v777 = vunpack.c.l.b16 %v580
        %v778 = vunpack.c.h.b16 %v580
        %v779 = vunpack.c.l.b16 %v581
        %v780 = vunpack.c.h.b16 %v581
        %v781 = vunpack.c.l.b16 %v582
        %v782 = vunpack.c.h.b16 %v582
        %v783 = vunpack.c.l.b16 %v583
        %v784 = vunpack.c.h.b16 %v583
        %v785 = vunpack.c.l.b16 %v584
        %v786 = vunpack.c.h.b16 %v584
        %v787 = vunpack.c.l.b16 %v585
        %v788 = vunpack.c.h.b16 %v585
        %v789 = vunpack.c.l.b16 %v586
        %v790 = vunpack.c.h.b16 %v586
        %v791 = vunpack.c.l.b16 %v587
        %v792 = vunpack.c.h.b16 %v587
        %v793 = vpack.c.b16 %v779, %v777
        %v794 = vpack.c.b16 %v780, %v778
        %v795 = vpack.c.b16 %v783, %v781
        %v796 = vpack.c.b16 %v784, %v782
        %v797 = vpack.c.b16 %v787, %v785
        %v798 = vpack.c.b16 %v788, %v786
        %v799 = vpack.c.b16 %v791, %v789
        %v800 = vpack.c.b16 %v792, %v790
        %v806 = vsel %vm687, %v794, 0
        %v809 = vsel %vm687, %v796, 0
        %v812 = vsel %vm687, %v798, 0
        %v815 = vsel %vm687, %v800, 0
        %v818 = vsel %vm700, %v526, 0
        %820 = vmatprep.subr.bf16.mxu0 0
        %821 = vmatpush1.bf16.msra.mxu0 %v525
        %822 = vmatprep.subr.bf16.mxu0 0
        %823 = vmatpush1.bf16.msra.mxu0 %v524
        %824 = vmatprep.subr.bf16.mxu0 0
        %825 = vmatpush1.bf16.msra.mxu0 %v523
        %826 = vmatprep.subr.bf16.mxu0 0
        %827 = vmatpush1.bf16.msra.mxu0 %v522
        %828 = vmatprep.subr.bf16.mxu0 0
        %829 = vmatpush1.bf16.msra.mxu0 %v521
        %830 = vmatprep.subr.bf16.mxu0 0
        %831 = vmatpush1.bf16.msra.mxu0 %v520
        %832 = vmatprep.subr.bf16.mxu0 0
        %833 = vmatpush1.bf16.msra.mxu0 %v519
        %834 = vmatprep.subr.bf16.mxu0 0
        %835 = vmatpush1.bf16.msra.mxu0 %v518
        %836 = vmatprep.subr.bf16.mxu0 0
        %837 = vmatpush2.bf16.msra.mxu0 0
        %838 = vmatprep.subr.bf16.mxu0 0
        %839 = vmatpush2.bf16.msra.mxu0 0
        %840 = vmatprep.subr.bf16.mxu0 0
        %841 = vmatpush2.bf16.msra.mxu0 0
        %842 = vmatprep.subr.bf16.mxu0 0
        %843 = vmatpush2.bf16.msra.mxu0 0
        %844 = vmatprep.subr.bf16.mxu0 0
        %845 = vmatpush2.bf16.msra.mxu0 0
        %846 = vmatprep.subr.bf16.mxu0 0
        %847 = vmatpush2.bf16.msra.mxu0 0
        %848 = vmatprep.subr.bf16.mxu0 0
        %849 = vmatpush2.bf16.msra.mxu0 0
        %850 = vmatprep.subr.bf16.mxu0 0
        %851 = vmatpush2.bf16.msra.mxu0 %v818
        %852 = vmatprep.mubr.bf16.mxu0 %v806
        %853 = vmatmul.mubr.bf16.gmra.mxu0 %v793
        %v854 = vpop.f32.mrf.mxu0
        %v855 = vadd.f32 %v739, %v854
        %v856 = vpop.f32.mrf.mxu0
        %v857 = vpop.f32.mrf.mxu0
        %v858 = vadd.f32 %v742, %v857
        %v859 = vpop.f32.mrf.mxu0
        %860 = vmatprep.mubr.bf16.mxu0 %v809
        %861 = vmatmul.mubr.bf16.gmra.mxu0 %v795
        %v862 = vpop.f32.mrf.mxu0
        %v863 = vadd.f32 %v747, %v862
        %v864 = vpop.f32.mrf.mxu0
        %v865 = vpop.f32.mrf.mxu0
        %v866 = vadd.f32 %v750, %v865
        %v867 = vpop.f32.mrf.mxu0
        %868 = vmatprep.mubr.bf16.mxu0 %v812
        %869 = vmatmul.mubr.bf16.gmra.mxu0 %v797
        %v870 = vpop.f32.mrf.mxu0
        %v871 = vadd.f32 %v755, %v870
        %v872 = vpop.f32.mrf.mxu0
        %v873 = vpop.f32.mrf.mxu0
        %v874 = vadd.f32 %v758, %v873
        %v875 = vpop.f32.mrf.mxu0
        %876 = vmatprep.mubr.bf16.mxu0 %v815
        %877 = vmatmul.mubr.bf16.gmra.mxu0 %v799
        %v878 = vpop.f32.mrf.mxu0
        %v879 = vadd.f32 %v763, %v878
        %v880 = vpop.f32.mrf.mxu0
        %v881 = vpop.f32.mrf.mxu0
        %v882 = vadd.f32 %v766, %v881
        %v883 = vpop.f32.mrf.mxu0
        %884 = vdwg.mxu0
        %s885 = scalar_lea.vmem %s2, 128
        %v886 = vld [vmem:[%s885] sm:$0xff]
        %v887 = vld [vmem:[%s885 + $0x8] sm:$0xff]
        %v888 = vld [vmem:[%s885 + $0x10] sm:$0xff]
        %v889 = vld [vmem:[%s885 + $0x18] sm:$0xff]
        %v890 = vld [vmem:[%s885 + $0x20] sm:$0xff]
        %v891 = vld [vmem:[%s885 + $0x28] sm:$0xff]
        %v892 = vld [vmem:[%s885 + $0x30] sm:$0xff]
        %v893 = vld [vmem:[%s885 + $0x38] sm:$0xff]
        %v902 = vunpack.c.l.b16 %v886
        %v903 = vunpack.c.h.b16 %v886
        %v904 = vunpack.c.l.b16 %v887
        %v905 = vunpack.c.h.b16 %v887
        %v906 = vunpack.c.l.b16 %v888
        %v907 = vunpack.c.h.b16 %v888
        %v908 = vunpack.c.l.b16 %v889
        %v909 = vunpack.c.h.b16 %v889
        %v910 = vunpack.c.l.b16 %v890
        %v911 = vunpack.c.h.b16 %v890
        %v912 = vunpack.c.l.b16 %v891
        %v913 = vunpack.c.h.b16 %v891
        %v914 = vunpack.c.l.b16 %v892
        %v915 = vunpack.c.h.b16 %v892
        %v916 = vunpack.c.l.b16 %v893
        %v917 = vunpack.c.h.b16 %v893
        %v918 = vpack.c.b16 %v904, %v902
        %v919 = vpack.c.b16 %v905, %v903
        %v920 = vpack.c.b16 %v908, %v906
        %v921 = vpack.c.b16 %v909, %v907
        %v922 = vpack.c.b16 %v912, %v910
        %v923 = vpack.c.b16 %v913, %v911
        %v924 = vpack.c.b16 %v916, %v914
        %v925 = vpack.c.b16 %v917, %v915
        %930 = vrot.lane.b32.xlu0 %v518, 126
        %v931 = vpop.permute.xlu0 %930
        %932 = vrot.lane.b32.xlu0 %v571, 126
        %v933 = vpop.permute.xlu0 %932
        %934 = vrot.lane.b32.xlu0 %v519, 126
        %v935 = vpop.permute.xlu0 %934
        %936 = vrot.lane.b32.xlu0 %v572, 126
        %v937 = vpop.permute.xlu0 %936
        %938 = vrot.lane.b32.xlu0 %v520, 126
        %v939 = vpop.permute.xlu0 %938
        %940 = vrot.lane.b32.xlu0 %v573, 126
        %v941 = vpop.permute.xlu0 %940
        %942 = vrot.lane.b32.xlu0 %v521, 126
        %v943 = vpop.permute.xlu0 %942
        %944 = vrot.lane.b32.xlu0 %v574, 126
        %v945 = vpop.permute.xlu0 %944
        %946 = vrot.lane.b32.xlu0 %v522, 126
        %v947 = vpop.permute.xlu0 %946
        %948 = vrot.lane.b32.xlu0 %v575, 126
        %v949 = vpop.permute.xlu0 %948
        %950 = vrot.lane.b32.xlu0 %v523, 126
        %v951 = vpop.permute.xlu0 %950
        %952 = vrot.lane.b32.xlu0 %v576, 126
        %v953 = vpop.permute.xlu0 %952
        %954 = vrot.lane.b32.xlu0 %v524, 126
        %v955 = vpop.permute.xlu0 %954
        %956 = vrot.lane.b32.xlu0 %v577, 126
        %v957 = vpop.permute.xlu0 %956
        %958 = vrot.lane.b32.xlu0 %v525, 126
        %v959 = vpop.permute.xlu0 %958
        %960 = vrot.lane.b32.xlu0 %v578, 126
        %v961 = vpop.permute.xlu0 %960
        %962 = vrot.lane.b32.xlu0 %v526, 126
        %v963 = vpop.permute.xlu0 %962
        %964 = vrot.lane.b32.xlu0 %v579, 126
        %v965 = vpop.permute.xlu0 %964
        %vm966 = vcmask 1031168
        %v967 = vsel %vm966, %v931, %v933
        %v968 = vsel %vm966, %v935, %v937
        %v969 = vsel %vm966, %v939, %v941
        %v970 = vsel %vm966, %v943, %v945
        %v971 = vsel %vm966, %v947, %v949
        %v972 = vsel %vm966, %v951, %v953
        %v973 = vsel %vm966, %v955, %v957
        %v974 = vsel %vm966, %v959, %v961
        %v975 = vsel %vm966, %v963, %v965
        %v985 = vsel %vm687, %v919, 0
        %v988 = vsel %vm687, %v921, 0
        %v991 = vsel %vm687, %v923, 0
        %v994 = vsel %vm687, %v925, 0
        %v997 = vsel %vm700, %v975, 0
        %999 = vmatprep.subr.bf16.mxu0 0
        %1000 = vmatpush1.bf16.msra.mxu0 %v974
        %1001 = vmatprep.subr.bf16.mxu0 0
        %1002 = vmatpush1.bf16.msra.mxu0 %v973
        %1003 = vmatprep.subr.bf16.mxu0 0
        %1004 = vmatpush1.bf16.msra.mxu0 %v972
        %1005 = vmatprep.subr.bf16.mxu0 0
        %1006 = vmatpush1.bf16.msra.mxu0 %v971
        %1007 = vmatprep.subr.bf16.mxu0 0
        %1008 = vmatpush1.bf16.msra.mxu0 %v970
        %1009 = vmatprep.subr.bf16.mxu0 0
        %1010 = vmatpush1.bf16.msra.mxu0 %v969
        %1011 = vmatprep.subr.bf16.mxu0 0
        %1012 = vmatpush1.bf16.msra.mxu0 %v968
        %1013 = vmatprep.subr.bf16.mxu0 0
        %1014 = vmatpush1.bf16.msra.mxu0 %v967
        %1015 = vmatprep.subr.bf16.mxu0 0
        %1016 = vmatpush2.bf16.msra.mxu0 0
        %1017 = vmatprep.subr.bf16.mxu0 0
        %1018 = vmatpush2.bf16.msra.mxu0 0
        %1019 = vmatprep.subr.bf16.mxu0 0
        %1020 = vmatpush2.bf16.msra.mxu0 0
        %1021 = vmatprep.subr.bf16.mxu0 0
        %1022 = vmatpush2.bf16.msra.mxu0 0
        %1023 = vmatprep.subr.bf16.mxu0 0
        %1024 = vmatpush2.bf16.msra.mxu0 0
        %1025 = vmatprep.subr.bf16.mxu0 0
        %1026 = vmatpush2.bf16.msra.mxu0 0
        %1027 = vmatprep.subr.bf16.mxu0 0
        %1028 = vmatpush2.bf16.msra.mxu0 0
        %1029 = vmatprep.subr.bf16.mxu0 0
        %1030 = vmatpush2.bf16.msra.mxu0 %v997
        %1031 = vmatprep.mubr.bf16.mxu0 %v985
        %1032 = vmatmul.mubr.bf16.gmra.mxu0 %v918
        %v1033 = vpop.f32.mrf.mxu0
        %v1034 = vadd.f32 0.0, %v1033
        %v1035 = vpop.f32.mrf.mxu0
        %v1036 = vpop.f32.mrf.mxu0
        %v1037 = vadd.f32 0.0, %v1036
        %v1038 = vpop.f32.mrf.mxu0
        %1039 = vmatprep.mubr.bf16.mxu0 %v988
        %1040 = vmatmul.mubr.bf16.gmra.mxu0 %v920
        %v1041 = vpop.f32.mrf.mxu0
        %v1042 = vadd.f32 0.0, %v1041
        %v1043 = vpop.f32.mrf.mxu0
        %v1044 = vpop.f32.mrf.mxu0
        %v1045 = vadd.f32 0.0, %v1044
        %v1046 = vpop.f32.mrf.mxu0
        %1047 = vmatprep.mubr.bf16.mxu0 %v991
        %1048 = vmatmul.mubr.bf16.gmra.mxu0 %v922
        %v1049 = vpop.f32.mrf.mxu0
        %v1050 = vadd.f32 0.0, %v1049
        %v1051 = vpop.f32.mrf.mxu0
        %v1052 = vpop.f32.mrf.mxu0
        %v1053 = vadd.f32 0.0, %v1052
        %v1054 = vpop.f32.mrf.mxu0
        %1055 = vmatprep.mubr.bf16.mxu0 %v994
        %1056 = vmatmul.mubr.bf16.gmra.mxu0 %v924
        %v1057 = vpop.f32.mrf.mxu0
        %v1058 = vadd.f32 0.0, %v1057
        %v1059 = vpop.f32.mrf.mxu0
        %v1060 = vpop.f32.mrf.mxu0
        %v1061 = vadd.f32 0.0, %v1060
        %v1062 = vpop.f32.mrf.mxu0
        %1063 = vdwg.mxu0
        %v1064 = vadd.f32 %v855, %v1034
        %v1065 = vadd.f32 %v858, %v1037
        %v1066 = vadd.f32 %v863, %v1042
        %v1067 = vadd.f32 %v866, %v1045
        %v1068 = vadd.f32 %v871, %v1050
        %v1069 = vadd.f32 %v874, %v1053
        %v1070 = vadd.f32 %v879, %v1058
        %v1071 = vadd.f32 %v882, %v1061
        %s1072 = scalar_lea.vmem %s2, 192
        %v1073 = vld [vmem:[%s1072] sm:$0xff]
        %v1074 = vld [vmem:[%s1072 + $0x8] sm:$0xff]
        %v1075 = vld [vmem:[%s1072 + $0x10] sm:$0xff]
        %v1076 = vld [vmem:[%s1072 + $0x18] sm:$0xff]
        %v1077 = vld [vmem:[%s1072 + $0x20] sm:$0xff]
        %v1078 = vld [vmem:[%s1072 + $0x28] sm:$0xff]
        %v1079 = vld [vmem:[%s1072 + $0x30] sm:$0xff]
        %v1080 = vld [vmem:[%s1072 + $0x38] sm:$0xff]
        %v1089 = vunpack.c.l.b16 %v1073
        %v1090 = vunpack.c.h.b16 %v1073
        %v1091 = vunpack.c.l.b16 %v1074
        %v1092 = vunpack.c.h.b16 %v1074
        %v1093 = vunpack.c.l.b16 %v1075
        %v1094 = vunpack.c.h.b16 %v1075
        %v1095 = vunpack.c.l.b16 %v1076
        %v1096 = vunpack.c.h.b16 %v1076
        %v1097 = vunpack.c.l.b16 %v1077
        %v1098 = vunpack.c.h.b16 %v1077
        %v1099 = vunpack.c.l.b16 %v1078
        %v1100 = vunpack.c.h.b16 %v1078
        %v1101 = vunpack.c.l.b16 %v1079
        %v1102 = vunpack.c.h.b16 %v1079
        %v1103 = vunpack.c.l.b16 %v1080
        %v1104 = vunpack.c.h.b16 %v1080
        %v1105 = vpack.c.b16 %v1091, %v1089
        %v1106 = vpack.c.b16 %v1092, %v1090
        %v1107 = vpack.c.b16 %v1095, %v1093
        %v1108 = vpack.c.b16 %v1096, %v1094
        %v1109 = vpack.c.b16 %v1099, %v1097
        %v1110 = vpack.c.b16 %v1100, %v1098
        %v1111 = vpack.c.b16 %v1103, %v1101
        %v1112 = vpack.c.b16 %v1104, %v1102
        %1117 = vrot.lane.b32.xlu0 %v518, 125
        %v1118 = vpop.permute.xlu0 %1117
        %1119 = vrot.lane.b32.xlu0 %v571, 125
        %v1120 = vpop.permute.xlu0 %1119
        %1121 = vrot.lane.b32.xlu0 %v519, 125
        %v1122 = vpop.permute.xlu0 %1121
        %1123 = vrot.lane.b32.xlu0 %v572, 125
        %v1124 = vpop.permute.xlu0 %1123
        %1125 = vrot.lane.b32.xlu0 %v520, 125
        %v1126 = vpop.permute.xlu0 %1125
        %1127 = vrot.lane.b32.xlu0 %v573, 125
        %v1128 = vpop.permute.xlu0 %1127
        %1129 = vrot.lane.b32.xlu0 %v521, 125
        %v1130 = vpop.permute.xlu0 %1129
        %1131 = vrot.lane.b32.xlu0 %v574, 125
        %v1132 = vpop.permute.xlu0 %1131
        %1133 = vrot.lane.b32.xlu0 %v522, 125
        %v1134 = vpop.permute.xlu0 %1133
        %1135 = vrot.lane.b32.xlu0 %v575, 125
        %v1136 = vpop.permute.xlu0 %1135
        %1137 = vrot.lane.b32.xlu0 %v523, 125
        %v1138 = vpop.permute.xlu0 %1137
        %1139 = vrot.lane.b32.xlu0 %v576, 125
        %v1140 = vpop.permute.xlu0 %1139
        %1141 = vrot.lane.b32.xlu0 %v524, 125
        %v1142 = vpop.permute.xlu0 %1141
        %1143 = vrot.lane.b32.xlu0 %v577, 125
        %v1144 = vpop.permute.xlu0 %1143
        %1145 = vrot.lane.b32.xlu0 %v525, 125
        %v1146 = vpop.permute.xlu0 %1145
        %1147 = vrot.lane.b32.xlu0 %v578, 125
        %v1148 = vpop.permute.xlu0 %1147
        %1149 = vrot.lane.b32.xlu0 %v526, 125
        %v1150 = vpop.permute.xlu0 %1149
        %1151 = vrot.lane.b32.xlu0 %v579, 125
        %v1152 = vpop.permute.xlu0 %1151
        %vm1153 = vcmask 1022976
        %v1154 = vsel %vm1153, %v1118, %v1120
        %v1155 = vsel %vm1153, %v1122, %v1124
        %v1156 = vsel %vm1153, %v1126, %v1128
        %v1157 = vsel %vm1153, %v1130, %v1132
        %v1158 = vsel %vm1153, %v1134, %v1136
        %v1159 = vsel %vm1153, %v1138, %v1140
        %v1160 = vsel %vm1153, %v1142, %v1144
        %v1161 = vsel %vm1153, %v1146, %v1148
        %v1162 = vsel %vm1153, %v1150, %v1152
        %v1172 = vsel %vm687, %v1106, 0
        %v1175 = vsel %vm687, %v1108, 0
        %v1178 = vsel %vm687, %v1110, 0
        %v1181 = vsel %vm687, %v1112, 0
        %v1184 = vsel %vm700, %v1162, 0
        %1186 = vmatprep.subr.bf16.mxu0 0
        %1187 = vmatpush1.bf16.msra.mxu0 %v1161
        %1188 = vmatprep.subr.bf16.mxu0 0
        %1189 = vmatpush1.bf16.msra.mxu0 %v1160
        %1190 = vmatprep.subr.bf16.mxu0 0
        %1191 = vmatpush1.bf16.msra.mxu0 %v1159
        %1192 = vmatprep.subr.bf16.mxu0 0
        %1193 = vmatpush1.bf16.msra.mxu0 %v1158
        %1194 = vmatprep.subr.bf16.mxu0 0
        %1195 = vmatpush1.bf16.msra.mxu0 %v1157
        %1196 = vmatprep.subr.bf16.mxu0 0
        %1197 = vmatpush1.bf16.msra.mxu0 %v1156
        %1198 = vmatprep.subr.bf16.mxu0 0
        %1199 = vmatpush1.bf16.msra.mxu0 %v1155
        %1200 = vmatprep.subr.bf16.mxu0 0
        %1201 = vmatpush1.bf16.msra.mxu0 %v1154
        %1202 = vmatprep.subr.bf16.mxu0 0
        %1203 = vmatpush2.bf16.msra.mxu0 0
        %1204 = vmatprep.subr.bf16.mxu0 0
        %1205 = vmatpush2.bf16.msra.mxu0 0
        %1206 = vmatprep.subr.bf16.mxu0 0
        %1207 = vmatpush2.bf16.msra.mxu0 0
        %1208 = vmatprep.subr.bf16.mxu0 0
        %1209 = vmatpush2.bf16.msra.mxu0 0
        %1210 = vmatprep.subr.bf16.mxu0 0
        %1211 = vmatpush2.bf16.msra.mxu0 0
        %1212 = vmatprep.subr.bf16.mxu0 0
        %1213 = vmatpush2.bf16.msra.mxu0 0
        %1214 = vmatprep.subr.bf16.mxu0 0
        %1215 = vmatpush2.bf16.msra.mxu0 0
        %1216 = vmatprep.subr.bf16.mxu0 0
        %1217 = vmatpush2.bf16.msra.mxu0 %v1184
        %1218 = vmatprep.mubr.bf16.mxu0 %v1172
        %1219 = vmatmul.mubr.bf16.gmra.mxu0 %v1105
        %v1220 = vpop.f32.mrf.mxu0
        %v1221 = vadd.f32 0.0, %v1220
        %v1222 = vpop.f32.mrf.mxu0
        %v1223 = vpop.f32.mrf.mxu0
        %v1224 = vadd.f32 0.0, %v1223
        %v1225 = vpop.f32.mrf.mxu0
        %1226 = vmatprep.mubr.bf16.mxu0 %v1175
        %1227 = vmatmul.mubr.bf16.gmra.mxu0 %v1107
        %v1228 = vpop.f32.mrf.mxu0
        %v1229 = vadd.f32 0.0, %v1228
        %v1230 = vpop.f32.mrf.mxu0
        %v1231 = vpop.f32.mrf.mxu0
        %v1232 = vadd.f32 0.0, %v1231
        %v1233 = vpop.f32.mrf.mxu0
        %1234 = vmatprep.mubr.bf16.mxu0 %v1178
        %1235 = vmatmul.mubr.bf16.gmra.mxu0 %v1109
        %v1236 = vpop.f32.mrf.mxu0
        %v1237 = vadd.f32 0.0, %v1236
        %v1238 = vpop.f32.mrf.mxu0
        %v1239 = vpop.f32.mrf.mxu0
        %v1240 = vadd.f32 0.0, %v1239
        %v1241 = vpop.f32.mrf.mxu0
        %1242 = vmatprep.mubr.bf16.mxu0 %v1181
        %1243 = vmatmul.mubr.bf16.gmra.mxu0 %v1111
        %v1244 = vpop.f32.mrf.mxu0
        %v1245 = vadd.f32 0.0, %v1244
        %v1246 = vpop.f32.mrf.mxu0
        %v1247 = vpop.f32.mrf.mxu0
        %v1248 = vadd.f32 0.0, %v1247
        %v1249 = vpop.f32.mrf.mxu0
        %1250 = vdwg.mxu0
        %v1251 = vadd.f32 %v1064, %v1221
        %v1252 = vadd.f32 %v1065, %v1224
        %v1253 = vadd.f32 %v1066, %v1229
        %v1254 = vadd.f32 %v1067, %v1232
        %v1255 = vadd.f32 %v1068, %v1237
        %v1256 = vadd.f32 %v1069, %v1240
        %v1257 = vadd.f32 %v1070, %v1245
        %v1258 = vadd.f32 %v1071, %v1248
        %s1259 = scalar_lea.vmem %s2, 256
        %v1260 = vld [vmem:[%s1259] sm:$0xff]
        %v1261 = vld [vmem:[%s1259 + $0x8] sm:$0xff]
        %v1262 = vld [vmem:[%s1259 + $0x10] sm:$0xff]
        %v1263 = vld [vmem:[%s1259 + $0x18] sm:$0xff]
        %v1264 = vld [vmem:[%s1259 + $0x20] sm:$0xff]
        %v1265 = vld [vmem:[%s1259 + $0x28] sm:$0xff]
        %v1266 = vld [vmem:[%s1259 + $0x30] sm:$0xff]
        %v1267 = vld [vmem:[%s1259 + $0x38] sm:$0xff]
        %v1276 = vunpack.c.l.b16 %v1260
        %v1277 = vunpack.c.h.b16 %v1260
        %v1278 = vunpack.c.l.b16 %v1261
        %v1279 = vunpack.c.h.b16 %v1261
        %v1280 = vunpack.c.l.b16 %v1262
        %v1281 = vunpack.c.h.b16 %v1262
        %v1282 = vunpack.c.l.b16 %v1263
        %v1283 = vunpack.c.h.b16 %v1263
        %v1284 = vunpack.c.l.b16 %v1264
        %v1285 = vunpack.c.h.b16 %v1264
        %v1286 = vunpack.c.l.b16 %v1265
        %v1287 = vunpack.c.h.b16 %v1265
        %v1288 = vunpack.c.l.b16 %v1266
        %v1289 = vunpack.c.h.b16 %v1266
        %v1290 = vunpack.c.l.b16 %v1267
        %v1291 = vunpack.c.h.b16 %v1267
        %v1292 = vpack.c.b16 %v1278, %v1276
        %v1293 = vpack.c.b16 %v1279, %v1277
        %v1294 = vpack.c.b16 %v1282, %v1280
        %v1295 = vpack.c.b16 %v1283, %v1281
        %v1296 = vpack.c.b16 %v1286, %v1284
        %v1297 = vpack.c.b16 %v1287, %v1285
        %v1298 = vpack.c.b16 %v1290, %v1288
        %v1299 = vpack.c.b16 %v1291, %v1289
        %1304 = vrot.lane.b32.xlu0 %v518, 124
        %v1305 = vpop.permute.xlu0 %1304
        %1306 = vrot.lane.b32.xlu0 %v571, 124
        %v1307 = vpop.permute.xlu0 %1306
        %1308 = vrot.lane.b32.xlu0 %v519, 124
        %v1309 = vpop.permute.xlu0 %1308
        %1310 = vrot.lane.b32.xlu0 %v572, 124
        %v1311 = vpop.permute.xlu0 %1310
        %1312 = vrot.lane.b32.xlu0 %v520, 124
        %v1313 = vpop.permute.xlu0 %1312
        %1314 = vrot.lane.b32.xlu0 %v573, 124
        %v1315 = vpop.permute.xlu0 %1314
        %1316 = vrot.lane.b32.xlu0 %v521, 124
        %v1317 = vpop.permute.xlu0 %1316
        %1318 = vrot.lane.b32.xlu0 %v574, 124
        %v1319 = vpop.permute.xlu0 %1318
        %1320 = vrot.lane.b32.xlu0 %v522, 124
        %v1321 = vpop.permute.xlu0 %1320
        %1322 = vrot.lane.b32.xlu0 %v575, 124
        %v1323 = vpop.permute.xlu0 %1322
        %1324 = vrot.lane.b32.xlu0 %v523, 124
        %v1325 = vpop.permute.xlu0 %1324
        %1326 = vrot.lane.b32.xlu0 %v576, 124
        %v1327 = vpop.permute.xlu0 %1326
        %1328 = vrot.lane.b32.xlu0 %v524, 124
        %v1329 = vpop.permute.xlu0 %1328
        %1330 = vrot.lane.b32.xlu0 %v577, 124
        %v1331 = vpop.permute.xlu0 %1330
        %1332 = vrot.lane.b32.xlu0 %v525, 124
        %v1333 = vpop.permute.xlu0 %1332
        %1334 = vrot.lane.b32.xlu0 %v578, 124
        %v1335 = vpop.permute.xlu0 %1334
        %1336 = vrot.lane.b32.xlu0 %v526, 124
        %v1337 = vpop.permute.xlu0 %1336
        %1338 = vrot.lane.b32.xlu0 %v579, 124
        %v1339 = vpop.permute.xlu0 %1338
        %vm1340 = vcmask 1014784
        %v1341 = vsel %vm1340, %v1305, %v1307
        %v1342 = vsel %vm1340, %v1309, %v1311
        %v1343 = vsel %vm1340, %v1313, %v1315
        %v1344 = vsel %vm1340, %v1317, %v1319
        %v1345 = vsel %vm1340, %v1321, %v1323
        %v1346 = vsel %vm1340, %v1325, %v1327
        %v1347 = vsel %vm1340, %v1329, %v1331
        %v1348 = vsel %vm1340, %v1333, %v1335
        %v1349 = vsel %vm1340, %v1337, %v1339
        %v1359 = vsel %vm687, %v1293, 0
        %v1362 = vsel %vm687, %v1295, 0
        %v1365 = vsel %vm687, %v1297, 0
        %v1368 = vsel %vm687, %v1299, 0
        %v1371 = vsel %vm700, %v1349, 0
        %1373 = vmatprep.subr.bf16.mxu0 0
        %1374 = vmatpush1.bf16.msra.mxu0 %v1348
        %1375 = vmatprep.subr.bf16.mxu0 0
        %1376 = vmatpush1.bf16.msra.mxu0 %v1347
        %1377 = vmatprep.subr.bf16.mxu0 0
        %1378 = vmatpush1.bf16.msra.mxu0 %v1346
        %1379 = vmatprep.subr.bf16.mxu0 0
        %1380 = vmatpush1.bf16.msra.mxu0 %v1345
        %1381 = vmatprep.subr.bf16.mxu0 0
        %1382 = vmatpush1.bf16.msra.mxu0 %v1344
        %1383 = vmatprep.subr.bf16.mxu0 0
        %1384 = vmatpush1.bf16.msra.mxu0 %v1343
        %1385 = vmatprep.subr.bf16.mxu0 0
        %1386 = vmatpush1.bf16.msra.mxu0 %v1342
        %1387 = vmatprep.subr.bf16.mxu0 0
        %1388 = vmatpush1.bf16.msra.mxu0 %v1341
        %1389 = vmatprep.subr.bf16.mxu0 0
        %1390 = vmatpush2.bf16.msra.mxu0 0
        %1391 = vmatprep.subr.bf16.mxu0 0
        %1392 = vmatpush2.bf16.msra.mxu0 0
        %1393 = vmatprep.subr.bf16.mxu0 0
        %1394 = vmatpush2.bf16.msra.mxu0 0
        %1395 = vmatprep.subr.bf16.mxu0 0
        %1396 = vmatpush2.bf16.msra.mxu0 0
        %1397 = vmatprep.subr.bf16.mxu0 0
        %1398 = vmatpush2.bf16.msra.mxu0 0
        %1399 = vmatprep.subr.bf16.mxu0 0
        %1400 = vmatpush2.bf16.msra.mxu0 0
        %1401 = vmatprep.subr.bf16.mxu0 0
        %1402 = vmatpush2.bf16.msra.mxu0 0
        %1403 = vmatprep.subr.bf16.mxu0 0
        %1404 = vmatpush2.bf16.msra.mxu0 %v1371
        %1405 = vmatprep.mubr.bf16.mxu0 %v1359
        %1406 = vmatmul.mubr.bf16.gmra.mxu0 %v1292
        %v1407 = vpop.f32.mrf.mxu0
        %v1408 = vadd.f32 0.0, %v1407
        %v1409 = vpop.f32.mrf.mxu0
        %v1410 = vpop.f32.mrf.mxu0
        %v1411 = vadd.f32 0.0, %v1410
        %v1412 = vpop.f32.mrf.mxu0
        %1413 = vmatprep.mubr.bf16.mxu0 %v1362
        %1414 = vmatmul.mubr.bf16.gmra.mxu0 %v1294
        %v1415 = vpop.f32.mrf.mxu0
        %v1416 = vadd.f32 0.0, %v1415
        %v1417 = vpop.f32.mrf.mxu0
        %v1418 = vpop.f32.mrf.mxu0
        %v1419 = vadd.f32 0.0, %v1418
        %v1420 = vpop.f32.mrf.mxu0
        %1421 = vmatprep.mubr.bf16.mxu0 %v1365
        %1422 = vmatmul.mubr.bf16.gmra.mxu0 %v1296
        %v1423 = vpop.f32.mrf.mxu0
        %v1424 = vadd.f32 0.0, %v1423
        %v1425 = vpop.f32.mrf.mxu0
        %v1426 = vpop.f32.mrf.mxu0
        %v1427 = vadd.f32 0.0, %v1426
        %v1428 = vpop.f32.mrf.mxu0
        %1429 = vmatprep.mubr.bf16.mxu0 %v1368
        %1430 = vmatmul.mubr.bf16.gmra.mxu0 %v1298
        %v1431 = vpop.f32.mrf.mxu0
        %v1432 = vadd.f32 0.0, %v1431
        %v1433 = vpop.f32.mrf.mxu0
        %v1434 = vpop.f32.mrf.mxu0
        %v1435 = vadd.f32 0.0, %v1434
        %v1436 = vpop.f32.mrf.mxu0
        %1437 = vdwg.mxu0
        %v1438 = vadd.f32 %v1251, %v1408
        %v1439 = vadd.f32 %v1252, %v1411
        %v1440 = vadd.f32 %v1253, %v1416
        %v1441 = vadd.f32 %v1254, %v1419
        %v1442 = vadd.f32 %v1255, %v1424
        %v1443 = vadd.f32 %v1256, %v1427
        %v1444 = vadd.f32 %v1257, %v1432
        %v1445 = vadd.f32 %v1258, %v1435
        %1446 = vst [vmem:[%s444] sm:$0xff] %v1438
        %1447 = vst [vmem:[%s444 + $0x8] sm:$0xff] %v1439
        %1448 = vst [vmem:[%s444 + $0x10] sm:$0xff] %v1440
        %1449 = vst [vmem:[%s444 + $0x18] sm:$0xff] %v1441
        %1450 = vst [vmem:[%s444 + $0x20] sm:$0xff] %v1442
        %1451 = vst [vmem:[%s444 + $0x28] sm:$0xff] %v1443
        %1452 = vst [vmem:[%s444 + $0x30] sm:$0xff] %v1444
        %1453 = vst [vmem:[%s444 + $0x38] sm:$0xff] %v1445
        %p1454 = scmp.lt.s32.totalorder %s18, 1
        %s1455 = scalar_select %p1454, %s18, 1
        %p1456 = scmp.lt.s32.totalorder %s19, 0
        %s1457 = scalar_select %p1456, %s19, 0
        %s1458 = smul.addr %s1455, 8
        %s1459 = sadd.s32 %s1457, %s1458
        %s1460 = smul.addr %s1459, 8
        %s1461 = scalar_lea.vmem %s3, %s1460
        // Predicated region
        $region115: #{extractor_forward.1} parent=105 // pred_check
          %p1462 = pneg %p125
        $region116: #{extractor_forward.1} parent=105 // pred_check_branch
          %1464 = sbr.rel (%p1462) target = $region118
        $region117: #{extractor_forward.1} parent=105 // pred_region
          _
        $region118: #{extractor_forward.1} parent=105 // pred_fallthru
          _
      $region106: #{extractor_forward.1} parent=5 // pred_fallthru
        _
      %p1465 = scmp.le.s32.totalorder 2, %s9
      // Predicated region
      $region119: #{extractor_forward.1} parent=5 // pred_check
        %p1466 = pneg %p1465
      $region120: #{extractor_forward.1} parent=5 // pred_check_branch
        %1468 = sbr.rel (%p1466) target = $region122
      $region121: #{extractor_forward.1} parent=5 // pred_region
        %s1469 = ssub.s32 %s9, 2
        // Predicated region
        $region123: #{extractor_forward.1} parent=121 // pred_check
          %p1470 = pneg %p131
        $region124: #{extractor_forward.1} parent=121 // pred_check_branch
          %1472 = sbr.rel (%p1470) target = $region126
        $region125: #{extractor_forward.1} parent=121 // pred_region
          %p1473 = scmp.lt.s32.totalorder %s20, 1
          %s1474 = scalar_select %p1473, %s20, 1
          %p1475 = scmp.lt.s32.totalorder %s21, 0
          %s1476 = scalar_select %p1475, %s21, 0
          %s1477 = smul.addr %s1474, 8
          %s1478 = sadd.s32 %s1476, %s1477
          %s1479 = smul.addr %s1478, 8
          %s1480 = scalar_lea.vmem %s3, %s1479
        $region126: #{extractor_forward.1} parent=121 // pred_fallthru
          _
      $region122: #{extractor_forward.1} parent=5 // pred_fallthru
        _
    $region6: #{extractor_forward.1} parent=1 // loop_footer
      %s13 = sadd.s32 1, %s9
    $region7: #{extractor_forward.1} parent=1 // loop_footer_branch
      %8 = sbr.rel target = $region3
    $region8: #{extractor_forward.1} parent=1 // loop_exit
      _

</llo_original>
